<compile_context>
chip_gen: v6e
topology: v6e:2x2x1
jax: 0.10.0
libtpu: 0.0.40
codegen_flags: <defaults>
</compile_context>

<pallas_src>
import jax
import jax.numpy as jnp
from jax import lax
from jax.experimental import pallas as pl
from jax.experimental.pallas import tpu as pltpu


def _fold_bn(gamma, beta, mean, var, eps=1e-5):
    scale = gamma / jnp.sqrt(var + eps)
    bias = beta - mean * scale
    return scale.astype(jnp.float32), bias.astype(jnp.float32)


def _make_basic_block_kernel(s, P, Hb, Ho, PHSIZE, has_shortcut):
    """Kernel factory.  All sizes are static Python ints.

    Layout recap (per image):
      x_ref   : (Cin, NPH*PHSIZE) bf16, NPH = s*s zero-embedded phases, each a
                flattened (PHROWS, P) buffer with a 1-row/1-col zero lead.
      h1_scr  : (planes, Hb*P) bf16 -- conv1 output embedded with a 1-pixel
                zero border (= conv2's padded input), pitch P, Hb = Ho+3.
      out_ref : (planes, Ho*P) f32 -- final result, pixel (i, j) at i*P + j
                (columns [Wo, P) are don't-care and sliced off in the wrapper).
    """
    HBP = Hb * P
    HOP = Ho * P

    def body(x_ref, w1_ref, b1_ref, m1_ref, w2_ref, bo_ref, wsc_ref,
             out_ref, h1_scr):
        # ---- conv1 (3x3, stride s, pad 1): 9 shifted-slice matmuls, f32 acc ----
        acc = None
        for kh in range(3):
            for kw in range(3):
                ph = (kh % s) * s + (kw % s)
                start = ph * PHSIZE + (kh // s) * P + (kw // s)
                xt = x_ref[:, start:start + HBP]          # (Cin, Hb*P) bf16
                wt = w1_ref[3 * kh + kw]                  # (planes, Cin) bf16
                d = jnp.dot(wt, xt, preferred_element_type=jnp.float32)
                acc = d if acc is None else acc + d
        # bn1 bias + relu, then zero the 1-pixel border / spillover rows with a
        # single VPU multiply (replaces strided border-zero stores).
        h1 = jnp.maximum(acc + b1_ref[...], 0.0) * m1_ref[...]
        h1_scr[...] = h1.astype(jnp.bfloat16)             # one contiguous store

        # ---- conv2 (3x3, stride 1, pad 1): 9 shifted-slice matmuls ----
        acc2 = None
        for kh in range(3):
            for kw in range(3):
                start = kh * P + kw
                ht = h1_scr[:, start:start + HOP]         # (planes, Ho*P) bf16
                wt = w2_ref[3 * kh + kw]                  # (planes, planes)
                d = jnp.dot(wt, ht, preferred_element_type=jnp.float32)
                acc2 = d if acc2 is None else acc2 + d
        acc2 = acc2 + bo_ref[...]      # bn2 bias (+ bnsc bias if shortcut conv)

        # ---- shortcut from the center-tap phase of the same input block ----
        ph_c = (1 % s) * s + (1 % s)
        sc_start = ph_c * PHSIZE + (1 + 1 // s) * P + (1 + 1 // s)
        xs = x_ref[:, sc_start:sc_start + HOP]            # (Cin, Ho*P) bf16
        if has_shortcut:
            sc = jnp.dot(wsc_ref[...], xs, preferred_element_type=jnp.float32)
        else:
            sc = xs.astype(jnp.float32)                   # identity (Cin==planes)

        out_ref[...] = jnp.maximum(acc2 + sc, 0.0)        # lane-dense store

    if has_shortcut:
        def kernel(x_ref, w1_ref, b1_ref, m1_ref, w2_ref, bo_ref, wsc_ref,
                   out_ref, h1_scr):
            body(x_ref, w1_ref, b1_ref, m1_ref, w2_ref, bo_ref, wsc_ref,
                 out_ref, h1_scr)
    else:
        def kernel(x_ref, w1_ref, b1_ref, m1_ref, w2_ref, bo_ref,
                   out_ref, h1_scr):
            body(x_ref, w1_ref, b1_ref, m1_ref, w2_ref, bo_ref, None,
                 out_ref, h1_scr)
    return kernel


def basic_block_forward(x_nchw, params, stride):
    """BasicBlock forward.  x_nchw: (N, Cin, H, W) f32.  Returns NCHW f32."""
    x = x_nchw.astype(jnp.bfloat16)                # cast early: bf16 glue traffic
    N, Cin, H, W = x.shape
    planes = params["w1"].shape[-1]
    s = int(stride)
    Ho = (H - 1) // s + 1
    Wo = (W - 1) // s + 1
    has_shortcut = (s != 1) or (Cin != planes)

    # ---- static geometry (pitch trick) ----
    Hph = Ho + 2 // s                  # phase rows/cols actually referenced
    Wph = Wo + 2 // s
    P = max(Wo + 2, Wph + 1)           # common flat row pitch
    Hb = Ho + 3                        # conv2 padded rows (+1 spillover row)
    PHROWS = Hb + 2 // s + 1           # per-phase buffer rows (zero padded)
    PHSIZE = PHROWS * P
    NPH = s * s
    HBP = Hb * P
    HOP = Ho * P

    # ---- glue: zero-pad, polyphase split, embed each phase with a 1/1 lead ----
    pad_b = s * Hph - (H + 1)
    pad_r = s * Wph - (W + 1)
    xpad = jnp.pad(x, ((0, 0), (0, 0), (1, pad_b), (1, pad_r)))
    phase_bufs = []
    for p in range(s):
        for q in range(s):
            ph = xpad[:, :, p::s, q::s]                    # (N, Cin, Hph, Wph)
            ph = jnp.pad(ph, ((0, 0), (0, 0),
                              (1, PHROWS - 1 - Hph), (1, P - 1 - Wph)))
            phase_bufs.append(ph.reshape(N, Cin, PHSIZE))
    xph = phase_bufs[0] if NPH == 1 else jnp.concatenate(phase_bufs, axis=-1)
    # xph: (N, Cin, NPH*PHSIZE) bf16

    # ---- fold BN scales into bf16 weights (output-channel rows) ----
    s1, b1 = _fold_bn(*params["bn1"])
    s2, b2 = _fold_bn(*params["bn2"])
    w1t = (jnp.transpose(params["w1"].astype(jnp.float32), (0, 1, 3, 2))
           .reshape(9, planes, Cin) * s1[None, :, None]).astype(jnp.bfloat16)
    w2t = (jnp.transpose(params["w2"].astype(jnp.float32), (0, 1, 3, 2))
           .reshape(9, planes, planes) * s2[None, :, None]).astype(jnp.bfloat16)
    b1c = b1.reshape(planes, 1)
    if has_shortcut:
        ssc, bsc = _fold_bn(*params["bnsc"])
        wsct = (jnp.transpose(params["wsc"].astype(jnp.float32)
                              .reshape(Cin, planes)) * ssc[:, None]
                ).astype(jnp.bfloat16)                     # (planes, Cin)
        bout = (b2 + bsc).reshape(planes, 1)
    else:
        wsct = None
        bout = b2.reshape(planes, 1)

    # validity mask for the conv1 output buffer: 1 on the Ho x Wo interior
    # (rows/cols 1..), 0 on the padding border and the spillover rows.
    rows = jnp.arange(Hb)
    cols = jnp.arange(P)
    mask = (((rows[:, None] >= 1) & (rows[:, None] <= Ho) &
             (cols[None, :] >= 1) & (cols[None, :] <= Wo))
            .astype(jnp.float32).reshape(1, HBP))

    kernel = _make_basic_block_kernel(s, P, Hb, Ho, PHSIZE, has_shortcut)

    in_specs = [
        pl.BlockSpec((None, Cin, NPH * PHSIZE), lambda n: (n, 0, 0)),
        pl.BlockSpec((9, planes, Cin), lambda n: (0, 0, 0)),
        pl.BlockSpec((planes, 1), lambda n: (0, 0)),
        pl.BlockSpec((1, HBP), lambda n: (0, 0)),
        pl.BlockSpec((9, planes, planes), lambda n: (0, 0, 0)),
        pl.BlockSpec((planes, 1), lambda n: (0, 0)),
    ]
    args = [xph, w1t, b1c, mask, w2t, bout]
    if has_shortcut:
        in_specs.append(pl.BlockSpec((planes, Cin), lambda n: (0, 0)))
        args.append(wsct)

    out = pl.pallas_call(
        kernel,
        out_shape=jax.ShapeDtypeStruct((N, planes, HOP), jnp.float32),
        grid=(N,),
        in_specs=in_specs,
        out_specs=pl.BlockSpec((None, planes, HOP), lambda n: (n, 0, 0)),
        scratch_shapes=[
            pltpu.VMEM((planes, HBP), jnp.bfloat16),   # padded conv1 output
        ],
        compiler_params=pltpu.CompilerParams(
            dimension_semantics=("parallel",),
            # Per-step VMEM use at BasicBlock shapes is well under 1 MiB now
            # that the im2col slabs are gone; 32 MiB fits every generation
            # (v5e default 16 MiB raised, v7x 64 MiB physical respected).
            vmem_limit_bytes=32 * 1024 * 1024),
    )(*args)

    # drop the 2-3 don't-care pitch columns; output is already NCHW.
    return out.reshape(N, planes, Ho, P)[:, :, :, :Wo]


def basic_block_reference(x_nchw, params, stride):
    """Pure-JAX reference (lax.conv, f32) for validation."""
    x = jnp.transpose(x_nchw, (0, 2, 3, 1)).astype(jnp.float32)
    dn = ("NHWC", "HWIO", "NHWC")

    def bn(y, p):
        gamma, beta, mean, var = p
        return (y - mean) / jnp.sqrt(var + 1e-5) * gamma + beta

    out = lax.conv_general_dilated(x, params["w1"], (stride, stride),
                                   ((1, 1), (1, 1)), dimension_numbers=dn)
    out = jax.nn.relu(bn(out, params["bn1"]))
    out = lax.conv_general_dilated(out, params["w2"], (1, 1),
                                   ((1, 1), (1, 1)), dimension_numbers=dn)
    out = bn(out, params["bn2"])
    Cin = x.shape[-1]
    planes = params["w1"].shape[-1]
    if stride != 1 or Cin != planes:
        sc = lax.conv_general_dilated(x, params["wsc"], (stride, stride),
                                      ((0, 0), (0, 0)), dimension_numbers=dn)
        sc = bn(sc, params["bnsc"])
    else:
        sc = x
    out = jax.nn.relu(out + sc)
    return jnp.transpose(out, (0, 3, 1, 2))


if __name__ == "__main__":
    def make_params(key, in_planes, planes, with_sc):
        ks = jax.random.split(key, 16)

        def bn_params(k0, k1, k2, k3, c):
            return (1.0 + 0.1 * jax.random.normal(ks[k0], (c,), jnp.float32),
                    0.1 * jax.random.normal(ks[k1], (c,), jnp.float32),
                    0.1 * jax.random.normal(ks[k2], (c,), jnp.float32),
                    0.5 + jax.random.uniform(ks[k3], (c,), jnp.float32))

        p = {
            "w1": 0.2 * jax.random.normal(ks[0], (3, 3, in_planes, planes), jnp.float32),
            "bn1": bn_params(1, 2, 3, 4, planes),
            "w2": 0.2 * jax.random.normal(ks[5], (3, 3, planes, planes), jnp.float32),
            "bn2": bn_params(6, 7, 8, 9, planes),
        }
        if with_sc:
            p["wsc"] = 0.2 * jax.random.normal(ks[10], (1, 1, in_planes, planes),
                                               jnp.float32)
            p["bnsc"] = bn_params(11, 12, 13, 14, planes)
        return p, ks[15]

    key = jax.random.PRNGKey(0)
    ka, kb = jax.random.split(key)

    # Config A: downsampling block with 1x1-conv shortcut (4 -> 8 ch, stride 2).
    N, in_planes, planes, H, W, stride = 2, 4, 8, 16, 16, 2
    params, kx = make_params(ka, in_planes, planes, True)
    x = jax.random.normal(kx, (N, in_planes, H, W), jnp.float32)
    out = jax.block_until_ready(basic_block_forward(x, params, stride))
    ref = basic_block_reference(x, params, stride)
    assert out.shape == (N, planes, H // stride, W // stride), out.shape
    err = float(jnp.max(jnp.abs(out - ref)))
    # bf16 matmuls (f32 accumulation) vs f32 reference -> loosened tolerance.
    assert err < 1e-1, f"config A mismatch vs reference: max abs err = {err}"

    # Config B: identity-shortcut block (8 -> 8 ch, stride 1).
    N, in_planes, planes, H, W, stride = 2, 8, 8, 16, 16, 1
    params, kx = make_params(kb, in_planes, planes, False)
    x = jax.random.normal(kx, (N, in_planes, H, W), jnp.float32)
    out = jax.block_until_ready(basic_block_forward(x, params, stride))
    ref = basic_block_reference(x, params, stride)
    assert out.shape == (N, planes, H, W), out.shape
    err = float(jnp.max(jnp.abs(out - ref)))
    assert err < 1e-1, f"config B mismatch vs reference: max abs err = {err}"

    print("KERNEL_OK")
</pallas_src>

<mosaic_0001>
module attributes {stable_mosaic.version = 11 : i64} {
  func.func @kernel(%arg0: i32, %arg1: memref<1x4x520xbf16, #tpu.memory_space<vmem>>, %arg2: memref<9x8x4xbf16, #tpu.memory_space<vmem>>, %arg3: memref<8x1xf32, #tpu.memory_space<vmem>>, %arg4: memref<1x110xf32, #tpu.memory_space<vmem>>, %arg5: memref<9x8x8xbf16, #tpu.memory_space<vmem>>, %arg6: memref<8x1xf32, #tpu.memory_space<vmem>>, %arg7: memref<8x4xbf16, #tpu.memory_space<vmem>>, %arg8: memref<1x8x80xf32, #tpu.memory_space<vmem>>, %arg9: memref<8x110xbf16, #tpu.memory_space<vmem>>) attributes {dimension_semantics = [#tpu.dimension_semantics<parallel>], iteration_bounds = array<i64: 2>, scalar_prefetch = 0 : i64, scratch_operands = 1 : i64, tpu.core_type = #tpu.core_type<tc>, window_params = [{transform_indices = @transform_0, window_bounds = array<i64: 1, 4, 520>}, {pipeline_mode = #tpu.pipeline_mode<synchronous>, transform_indices = @transform_1, window_bounds = array<i64: 9, 8, 4>}, {pipeline_mode = #tpu.pipeline_mode<synchronous>, transform_indices = @transform_2, window_bounds = array<i64: 8, 1>}, {pipeline_mode = #tpu.pipeline_mode<synchronous>, transform_indices = @transform_3, window_bounds = array<i64: 1, 110>}, {pipeline_mode = #tpu.pipeline_mode<synchronous>, transform_indices = @transform_4, window_bounds = array<i64: 9, 8, 8>}, {pipeline_mode = #tpu.pipeline_mode<synchronous>, transform_indices = @transform_5, window_bounds = array<i64: 8, 1>}, {pipeline_mode = #tpu.pipeline_mode<synchronous>, transform_indices = @transform_6, window_bounds = array<i64: 8, 4>}, {transform_indices = @transform_7, window_bounds = array<i64: 1, 8, 80>}]} {
    %c0 = arith.constant 0 : index
    %c0_0 = arith.constant 0 : index
    %c0_1 = arith.constant 0 : index
    %0 = vector.load %arg1[%c0, %c0_0, %c0_1] : memref<1x4x520xbf16, #tpu.memory_space<vmem>>, vector<1x4x110xbf16>
    %1 = vector.shape_cast %0 : vector<1x4x110xbf16> to vector<4x110xbf16>
    %c0_2 = arith.constant 0 : index
    %c0_3 = arith.constant 0 : index
    %c0_4 = arith.constant 0 : index
    %2 = vector.load %arg2[%c0_2, %c0_3, %c0_4] : memref<9x8x4xbf16, #tpu.memory_space<vmem>>, vector<1x8x4xbf16>
    %3 = vector.shape_cast %2 : vector<1x8x4xbf16> to vector<8x4xbf16>
    %cst = arith.constant dense<0.000000e+00> : vector<8x110xf32>
    %4 = tpu.matmul %3, %1, %cst {dimension_numbers = #tpu.dot_dimension_numbers<[1], [0], [0], [1], [0, 0, 1, 1], [], []>} : vector<8x4xbf16>, vector<4x110xbf16>, vector<8x110xf32> -> vector<8x110xf32>
    %c0_5 = arith.constant 0 : index
    %c0_6 = arith.constant 0 : index
    %c130 = arith.constant 130 : index
    %5 = vector.load %arg1[%c0_5, %c0_6, %c130] : memref<1x4x520xbf16, #tpu.memory_space<vmem>>, vector<1x4x110xbf16>
    %6 = vector.shape_cast %5 : vector<1x4x110xbf16> to vector<4x110xbf16>
    %c1 = arith.constant 1 : index
    %c0_7 = arith.constant 0 : index
    %c0_8 = arith.constant 0 : index
    %7 = vector.load %arg2[%c1, %c0_7, %c0_8] : memref<9x8x4xbf16, #tpu.memory_space<vmem>>, vector<1x8x4xbf16>
    %8 = vector.shape_cast %7 : vector<1x8x4xbf16> to vector<8x4xbf16>
    %cst_9 = arith.constant dense<0.000000e+00> : vector<8x110xf32>
    %9 = tpu.matmul %8, %6, %cst_9 {dimension_numbers = #tpu.dot_dimension_numbers<[1], [0], [0], [1], [0, 0, 1, 1], [], []>} : vector<8x4xbf16>, vector<4x110xbf16>, vector<8x110xf32> -> vector<8x110xf32>
    %10 = arith.addf %4, %9 : vector<8x110xf32>
    %c0_10 = arith.constant 0 : index
    %c0_11 = arith.constant 0 : index
    %c1_12 = arith.constant 1 : index
    %11 = vector.load %arg1[%c0_10, %c0_11, %c1_12] : memref<1x4x520xbf16, #tpu.memory_space<vmem>>, vector<1x4x110xbf16>
    %12 = vector.shape_cast %11 : vector<1x4x110xbf16> to vector<4x110xbf16>
    %c2 = arith.constant 2 : index
    %c0_13 = arith.constant 0 : index
    %c0_14 = arith.constant 0 : index
    %13 = vector.load %arg2[%c2, %c0_13, %c0_14] : memref<9x8x4xbf16, #tpu.memory_space<vmem>>, vector<1x8x4xbf16>
    %14 = vector.shape_cast %13 : vector<1x8x4xbf16> to vector<8x4xbf16>
    %cst_15 = arith.constant dense<0.000000e+00> : vector<8x110xf32>
    %15 = tpu.matmul %14, %12, %cst_15 {dimension_numbers = #tpu.dot_dimension_numbers<[1], [0], [0], [1], [0, 0, 1, 1], [], []>} : vector<8x4xbf16>, vector<4x110xbf16>, vector<8x110xf32> -> vector<8x110xf32>
    %16 = arith.addf %10, %15 : vector<8x110xf32>
    %c0_16 = arith.constant 0 : index
    %c0_17 = arith.constant 0 : index
    %c260 = arith.constant 260 : index
    %17 = vector.load %arg1[%c0_16, %c0_17, %c260] : memref<1x4x520xbf16, #tpu.memory_space<vmem>>, vector<1x4x110xbf16>
    %18 = vector.shape_cast %17 : vector<1x4x110xbf16> to vector<4x110xbf16>
    %c3 = arith.constant 3 : index
    %c0_18 = arith.constant 0 : index
    %c0_19 = arith.constant 0 : index
    %19 = vector.load %arg2[%c3, %c0_18, %c0_19] : memref<9x8x4xbf16, #tpu.memory_space<vmem>>, vector<1x8x4xbf16>
    %20 = vector.shape_cast %19 : vector<1x8x4xbf16> to vector<8x4xbf16>
    %cst_20 = arith.constant dense<0.000000e+00> : vector<8x110xf32>
    %21 = tpu.matmul %20, %18, %cst_20 {dimension_numbers = #tpu.dot_dimension_numbers<[1], [0], [0], [1], [0, 0, 1, 1], [], []>} : vector<8x4xbf16>, vector<4x110xbf16>, vector<8x110xf32> -> vector<8x110xf32>
    %22 = arith.addf %16, %21 : vector<8x110xf32>
    %c0_21 = arith.constant 0 : index
    %c0_22 = arith.constant 0 : index
    %c390 = arith.constant 390 : index
    %23 = vector.load %arg1[%c0_21, %c0_22, %c390] : memref<1x4x520xbf16, #tpu.memory_space<vmem>>, vector<1x4x110xbf16>
    %24 = vector.shape_cast %23 : vector<1x4x110xbf16> to vector<4x110xbf16>
    %c4 = arith.constant 4 : index
    %c0_23 = arith.constant 0 : index
    %c0_24 = arith.constant 0 : index
    %25 = vector.load %arg2[%c4, %c0_23, %c0_24] : memref<9x8x4xbf16, #tpu.memory_space<vmem>>, vector<1x8x4xbf16>
    %26 = vector.shape_cast %25 : vector<1x8x4xbf16> to vector<8x4xbf16>
    %cst_25 = arith.constant dense<0.000000e+00> : vector<8x110xf32>
    %27 = tpu.matmul %26, %24, %cst_25 {dimension_numbers = #tpu.dot_dimension_numbers<[1], [0], [0], [1], [0, 0, 1, 1], [], []>} : vector<8x4xbf16>, vector<4x110xbf16>, vector<8x110xf32> -> vector<8x110xf32>
    %28 = arith.addf %22, %27 : vector<8x110xf32>
    %c0_26 = arith.constant 0 : index
    %c0_27 = arith.constant 0 : index
    %c261 = arith.constant 261 : index
    %29 = vector.load %arg1[%c0_26, %c0_27, %c261] : memref<1x4x520xbf16, #tpu.memory_space<vmem>>, vector<1x4x110xbf16>
    %30 = vector.shape_cast %29 : vector<1x4x110xbf16> to vector<4x110xbf16>
    %c5 = arith.constant 5 : index
    %c0_28 = arith.constant 0 : index
    %c0_29 = arith.constant 0 : index
    %31 = vector.load %arg2[%c5, %c0_28, %c0_29] : memref<9x8x4xbf16, #tpu.memory_space<vmem>>, vector<1x8x4xbf16>
    %32 = vector.shape_cast %31 : vector<1x8x4xbf16> to vector<8x4xbf16>
    %cst_30 = arith.constant dense<0.000000e+00> : vector<8x110xf32>
    %33 = tpu.matmul %32, %30, %cst_30 {dimension_numbers = #tpu.dot_dimension_numbers<[1], [0], [0], [1], [0, 0, 1, 1], [], []>} : vector<8x4xbf16>, vector<4x110xbf16>, vector<8x110xf32> -> vector<8x110xf32>
    %34 = arith.addf %28, %33 : vector<8x110xf32>
    %c0_31 = arith.constant 0 : index
    %c0_32 = arith.constant 0 : index
    %c10 = arith.constant 10 : index
    %35 = vector.load %arg1[%c0_31, %c0_32, %c10] : memref<1x4x520xbf16, #tpu.memory_space<vmem>>, vector<1x4x110xbf16>
    %36 = vector.shape_cast %35 : vector<1x4x110xbf16> to vector<4x110xbf16>
    %c6 = arith.constant 6 : index
    %c0_33 = arith.constant 0 : index
    %c0_34 = arith.constant 0 : index
    %37 = vector.load %arg2[%c6, %c0_33, %c0_34] : memref<9x8x4xbf16, #tpu.memory_space<vmem>>, vector<1x8x4xbf16>
    %38 = vector.shape_cast %37 : vector<1x8x4xbf16> to vector<8x4xbf16>
    %cst_35 = arith.constant dense<0.000000e+00> : vector<8x110xf32>
    %39 = tpu.matmul %38, %36, %cst_35 {dimension_numbers = #tpu.dot_dimension_numbers<[1], [0], [0], [1], [0, 0, 1, 1], [], []>} : vector<8x4xbf16>, vector<4x110xbf16>, vector<8x110xf32> -> vector<8x110xf32>
    %40 = arith.addf %34, %39 : vector<8x110xf32>
    %c0_36 = arith.constant 0 : index
    %c0_37 = arith.constant 0 : index
    %c140 = arith.constant 140 : index
    %41 = vector.load %arg1[%c0_36, %c0_37, %c140] : memref<1x4x520xbf16, #tpu.memory_space<vmem>>, vector<1x4x110xbf16>
    %42 = vector.shape_cast %41 : vector<1x4x110xbf16> to vector<4x110xbf16>
    %c7 = arith.constant 7 : index
    %c0_38 = arith.constant 0 : index
    %c0_39 = arith.constant 0 : index
    %43 = vector.load %arg2[%c7, %c0_38, %c0_39] : memref<9x8x4xbf16, #tpu.memory_space<vmem>>, vector<1x8x4xbf16>
    %44 = vector.shape_cast %43 : vector<1x8x4xbf16> to vector<8x4xbf16>
    %cst_40 = arith.constant dense<0.000000e+00> : vector<8x110xf32>
    %45 = tpu.matmul %44, %42, %cst_40 {dimension_numbers = #tpu.dot_dimension_numbers<[1], [0], [0], [1], [0, 0, 1, 1], [], []>} : vector<8x4xbf16>, vector<4x110xbf16>, vector<8x110xf32> -> vector<8x110xf32>
    %46 = arith.addf %40, %45 : vector<8x110xf32>
    %c0_41 = arith.constant 0 : index
    %c0_42 = arith.constant 0 : index
    %c11 = arith.constant 11 : index
    %47 = vector.load %arg1[%c0_41, %c0_42, %c11] : memref<1x4x520xbf16, #tpu.memory_space<vmem>>, vector<1x4x110xbf16>
    %48 = vector.shape_cast %47 : vector<1x4x110xbf16> to vector<4x110xbf16>
    %c8 = arith.constant 8 : index
    %c0_43 = arith.constant 0 : index
    %c0_44 = arith.constant 0 : index
    %49 = vector.load %arg2[%c8, %c0_43, %c0_44] : memref<9x8x4xbf16, #tpu.memory_space<vmem>>, vector<1x8x4xbf16>
    %50 = vector.shape_cast %49 : vector<1x8x4xbf16> to vector<8x4xbf16>
    %cst_45 = arith.constant dense<0.000000e+00> : vector<8x110xf32>
    %51 = tpu.matmul %50, %48, %cst_45 {dimension_numbers = #tpu.dot_dimension_numbers<[1], [0], [0], [1], [0, 0, 1, 1], [], []>} : vector<8x4xbf16>, vector<4x110xbf16>, vector<8x110xf32> -> vector<8x110xf32>
    %52 = arith.addf %46, %51 : vector<8x110xf32>
    %c0_46 = arith.constant 0 : index
    %c0_47 = arith.constant 0 : index
    %53 = vector.load %arg3[%c0_46, %c0_47] : memref<8x1xf32, #tpu.memory_space<vmem>>, vector<8x1xf32>
    %54 = vector.broadcast %53 : vector<8x1xf32> to vector<8x110xf32>
    %55 = arith.addf %52, %54 : vector<8x110xf32>
    %cst_48 = arith.constant 0.000000e+00 : f32
    %56 = vector.broadcast %cst_48 : f32 to vector<8x110xf32>
    %57 = arith.maximumf %55, %56 : vector<8x110xf32>
    %c0_49 = arith.constant 0 : index
    %c0_50 = arith.constant 0 : index
    %58 = vector.load %arg4[%c0_49, %c0_50] : memref<1x110xf32, #tpu.memory_space<vmem>>, vector<1x110xf32>
    %59 = vector.broadcast %58 : vector<1x110xf32> to vector<8x110xf32>
    %60 = arith.mulf %57, %59 : vector<8x110xf32>
    %61 = arith.truncf %60 : vector<8x110xf32> to vector<8x110xbf16>
    %c0_51 = arith.constant 0 : index
    %c0_52 = arith.constant 0 : index
    %62 = vector.load %arg9[%c0_51, %c0_52] : memref<8x110xbf16, #tpu.memory_space<vmem>>, vector<8x110xbf16>
    tpu.vector_store %arg9[%c0_51, %c0_52], %61 {strides = array<i32>} : memref<8x110xbf16, #tpu.memory_space<vmem>>, vector<8x110xbf16>,
    %c0_53 = arith.constant 0 : index
    %c0_54 = arith.constant 0 : index
    %63 = vector.load %arg9[%c0_53, %c0_54] : memref<8x110xbf16, #tpu.memory_space<vmem>>, vector<8x80xbf16>
    %c0_55 = arith.constant 0 : index
    %c0_56 = arith.constant 0 : index
    %c0_57 = arith.constant 0 : index
    %64 = vector.load %arg5[%c0_55, %c0_56, %c0_57] : memref<9x8x8xbf16, #tpu.memory_space<vmem>>, vector<1x8x8xbf16>
    %65 = vector.shape_cast %64 : vector<1x8x8xbf16> to vector<8x8xbf16>
    %cst_58 = arith.constant dense<0.000000e+00> : vector<8x80xf32>
    %66 = tpu.matmul %65, %63, %cst_58 {dimension_numbers = #tpu.dot_dimension_numbers<[1], [0], [0], [1], [0, 0, 1, 1], [], []>} : vector<8x8xbf16>, vector<8x80xbf16>, vector<8x80xf32> -> vector<8x80xf32>
    %c0_59 = arith.constant 0 : index
    %c1_60 = arith.constant 1 : index
    %67 = vector.load %arg9[%c0_59, %c1_60] : memref<8x110xbf16, #tpu.memory_space<vmem>>, vector<8x80xbf16>
    %c1_61 = arith.constant 1 : index
    %c0_62 = arith.constant 0 : index
    %c0_63 = arith.constant 0 : index
    %68 = vector.load %arg5[%c1_61, %c0_62, %c0_63] : memref<9x8x8xbf16, #tpu.memory_space<vmem>>, vector<1x8x8xbf16>
    %69 = vector.shape_cast %68 : vector<1x8x8xbf16> to vector<8x8xbf16>
    %cst_64 = arith.constant dense<0.000000e+00> : vector<8x80xf32>
    %70 = tpu.matmul %69, %67, %cst_64 {dimension_numbers = #tpu.dot_dimension_numbers<[1], [0], [0], [1], [0, 0, 1, 1], [], []>} : vector<8x8xbf16>, vector<8x80xbf16>, vector<8x80xf32> -> vector<8x80xf32>
    %71 = arith.addf %66, %70 : vector<8x80xf32>
    %c0_65 = arith.constant 0 : index
    %c2_66 = arith.constant 2 : index
    %72 = vector.load %arg9[%c0_65, %c2_66] : memref<8x110xbf16, #tpu.memory_space<vmem>>, vector<8x80xbf16>
    %c2_67 = arith.constant 2 : index
    %c0_68 = arith.constant 0 : index
    %c0_69 = arith.constant 0 : index
    %73 = vector.load %arg5[%c2_67, %c0_68, %c0_69] : memref<9x8x8xbf16, #tpu.memory_space<vmem>>, vector<1x8x8xbf16>
    %74 = vector.shape_cast %73 : vector<1x8x8xbf16> to vector<8x8xbf16>
    %cst_70 = arith.constant dense<0.000000e+00> : vector<8x80xf32>
    %75 = tpu.matmul %74, %72, %cst_70 {dimension_numbers = #tpu.dot_dimension_numbers<[1], [0], [0], [1], [0, 0, 1, 1], [], []>} : vector<8x8xbf16>, vector<8x80xbf16>, vector<8x80xf32> -> vector<8x80xf32>
    %76 = arith.addf %71, %75 : vector<8x80xf32>
    %c0_71 = arith.constant 0 : index
    %c10_72 = arith.constant 10 : index
    %77 = vector.load %arg9[%c0_71, %c10_72] : memref<8x110xbf16, #tpu.memory_space<vmem>>, vector<8x80xbf16>
    %c3_73 = arith.constant 3 : index
    %c0_74 = arith.constant 0 : index
    %c0_75 = arith.constant 0 : index
    %78 = vector.load %arg5[%c3_73, %c0_74, %c0_75] : memref<9x8x8xbf16, #tpu.memory_space<vmem>>, vector<1x8x8xbf16>
    %79 = vector.shape_cast %78 : vector<1x8x8xbf16> to vector<8x8xbf16>
    %cst_76 = arith.constant dense<0.000000e+00> : vector<8x80xf32>
    %80 = tpu.matmul %79, %77, %cst_76 {dimension_numbers = #tpu.dot_dimension_numbers<[1], [0], [0], [1], [0, 0, 1, 1], [], []>} : vector<8x8xbf16>, vector<8x80xbf16>, vector<8x80xf32> -> vector<8x80xf32>
    %81 = arith.addf %76, %80 : vector<8x80xf32>
    %c0_77 = arith.constant 0 : index
    %c11_78 = arith.constant 11 : index
    %82 = vector.load %arg9[%c0_77, %c11_78] : memref<8x110xbf16, #tpu.memory_space<vmem>>, vector<8x80xbf16>
    %c4_79 = arith.constant 4 : index
    %c0_80 = arith.constant 0 : index
    %c0_81 = arith.constant 0 : index
    %83 = vector.load %arg5[%c4_79, %c0_80, %c0_81] : memref<9x8x8xbf16, #tpu.memory_space<vmem>>, vector<1x8x8xbf16>
    %84 = vector.shape_cast %83 : vector<1x8x8xbf16> to vector<8x8xbf16>
    %cst_82 = arith.constant dense<0.000000e+00> : vector<8x80xf32>
    %85 = tpu.matmul %84, %82, %cst_82 {dimension_numbers = #tpu.dot_dimension_numbers<[1], [0], [0], [1], [0, 0, 1, 1], [], []>} : vector<8x8xbf16>, vector<8x80xbf16>, vector<8x80xf32> -> vector<8x80xf32>
    %86 = arith.addf %81, %85 : vector<8x80xf32>
    %c0_83 = arith.constant 0 : index
    %c12 = arith.constant 12 : index
    %87 = vector.load %arg9[%c0_83, %c12] : memref<8x110xbf16, #tpu.memory_space<vmem>>, vector<8x80xbf16>
    %c5_84 = arith.constant 5 : index
    %c0_85 = arith.constant 0 : index
    %c0_86 = arith.constant 0 : index
    %88 = vector.load %arg5[%c5_84, %c0_85, %c0_86] : memref<9x8x8xbf16, #tpu.memory_space<vmem>>, vector<1x8x8xbf16>
    %89 = vector.shape_cast %88 : vector<1x8x8xbf16> to vector<8x8xbf16>
    %cst_87 = arith.constant dense<0.000000e+00> : vector<8x80xf32>
    %90 = tpu.matmul %89, %87, %cst_87 {dimension_numbers = #tpu.dot_dimension_numbers<[1], [0], [0], [1], [0, 0, 1, 1], [], []>} : vector<8x8xbf16>, vector<8x80xbf16>, vector<8x80xf32> -> vector<8x80xf32>
    %91 = arith.addf %86, %90 : vector<8x80xf32>
    %c0_88 = arith.constant 0 : index
    %c20 = arith.constant 20 : index
    %92 = vector.load %arg9[%c0_88, %c20] : memref<8x110xbf16, #tpu.memory_space<vmem>>, vector<8x80xbf16>
    %c6_89 = arith.constant 6 : index
    %c0_90 = arith.constant 0 : index
    %c0_91 = arith.constant 0 : index
    %93 = vector.load %arg5[%c6_89, %c0_90, %c0_91] : memref<9x8x8xbf16, #tpu.memory_space<vmem>>, vector<1x8x8xbf16>
    %94 = vector.shape_cast %93 : vector<1x8x8xbf16> to vector<8x8xbf16>
    %cst_92 = arith.constant dense<0.000000e+00> : vector<8x80xf32>
    %95 = tpu.matmul %94, %92, %cst_92 {dimension_numbers = #tpu.dot_dimension_numbers<[1], [0], [0], [1], [0, 0, 1, 1], [], []>} : vector<8x8xbf16>, vector<8x80xbf16>, vector<8x80xf32> -> vector<8x80xf32>
    %96 = arith.addf %91, %95 : vector<8x80xf32>
    %c0_93 = arith.constant 0 : index
    %c21 = arith.constant 21 : index
    %97 = vector.load %arg9[%c0_93, %c21] : memref<8x110xbf16, #tpu.memory_space<vmem>>, vector<8x80xbf16>
    %c7_94 = arith.constant 7 : index
    %c0_95 = arith.constant 0 : index
    %c0_96 = arith.constant 0 : index
    %98 = vector.load %arg5[%c7_94, %c0_95, %c0_96] : memref<9x8x8xbf16, #tpu.memory_space<vmem>>, vector<1x8x8xbf16>
    %99 = vector.shape_cast %98 : vector<1x8x8xbf16> to vector<8x8xbf16>
    %cst_97 = arith.constant dense<0.000000e+00> : vector<8x80xf32>
    %100 = tpu.matmul %99, %97, %cst_97 {dimension_numbers = #tpu.dot_dimension_numbers<[1], [0], [0], [1], [0, 0, 1, 1], [], []>} : vector<8x8xbf16>, vector<8x80xbf16>, vector<8x80xf32> -> vector<8x80xf32>
    %101 = arith.addf %96, %100 : vector<8x80xf32>
    %c0_98 = arith.constant 0 : index
    %c22 = arith.constant 22 : index
    %102 = vector.load %arg9[%c0_98, %c22] : memref<8x110xbf16, #tpu.memory_space<vmem>>, vector<8x80xbf16>
    %c8_99 = arith.constant 8 : index
    %c0_100 = arith.constant 0 : index
    %c0_101 = arith.constant 0 : index
    %103 = vector.load %arg5[%c8_99, %c0_100, %c0_101] : memref<9x8x8xbf16, #tpu.memory_space<vmem>>, vector<1x8x8xbf16>
    %104 = vector.shape_cast %103 : vector<1x8x8xbf16> to vector<8x8xbf16>
    %cst_102 = arith.constant dense<0.000000e+00> : vector<8x80xf32>
    %105 = tpu.matmul %104, %102, %cst_102 {dimension_numbers = #tpu.dot_dimension_numbers<[1], [0], [0], [1], [0, 0, 1, 1], [], []>} : vector<8x8xbf16>, vector<8x80xbf16>, vector<8x80xf32> -> vector<8x80xf32>
    %106 = arith.addf %101, %105 : vector<8x80xf32>
    %c0_103 = arith.constant 0 : index
    %c0_104 = arith.constant 0 : index
    %107 = vector.load %arg6[%c0_103, %c0_104] : memref<8x1xf32, #tpu.memory_space<vmem>>, vector<8x1xf32>
    %108 = vector.broadcast %107 : vector<8x1xf32> to vector<8x80xf32>
    %109 = arith.addf %106, %108 : vector<8x80xf32>
    %c0_105 = arith.constant 0 : index
    %c0_106 = arith.constant 0 : index
    %c401 = arith.constant 401 : index
    %110 = vector.load %arg1[%c0_105, %c0_106, %c401] : memref<1x4x520xbf16, #tpu.memory_space<vmem>>, vector<1x4x80xbf16>
    %111 = vector.shape_cast %110 : vector<1x4x80xbf16> to vector<4x80xbf16>
    %c0_107 = arith.constant 0 : index
    %c0_108 = arith.constant 0 : index
    %112 = vector.load %arg7[%c0_107, %c0_108] : memref<8x4xbf16, #tpu.memory_space<vmem>>, vector<8x4xbf16>
    %cst_109 = arith.constant dense<0.000000e+00> : vector<8x80xf32>
    %113 = tpu.matmul %112, %111, %cst_109 {dimension_numbers = #tpu.dot_dimension_numbers<[1], [0], [0], [1], [0, 0, 1, 1], [], []>} : vector<8x4xbf16>, vector<4x80xbf16>, vector<8x80xf32> -> vector<8x80xf32>
    %114 = arith.addf %109, %113 : vector<8x80xf32>
    %cst_110 = arith.constant 0.000000e+00 : f32
    %115 = vector.broadcast %cst_110 : f32 to vector<8x80xf32>
    %116 = arith.maximumf %114, %115 : vector<8x80xf32>
    %c0_111 = arith.constant 0 : index
    %c0_112 = arith.constant 0 : index
    %c0_113 = arith.constant 0 : index
    %117 = vector.load %arg8[%c0_111, %c0_112, %c0_113] : memref<1x8x80xf32, #tpu.memory_space<vmem>>, vector<1x8x80xf32>
    %118 = vector.shape_cast %117 : vector<1x8x80xf32> to vector<8x80xf32>
    %119 = vector.shape_cast %116 : vector<8x80xf32> to vector<1x8x80xf32>
    tpu.vector_store %arg8[%c0_111, %c0_112, %c0_113], %119 {strides = array<i32>} : memref<1x8x80xf32, #tpu.memory_space<vmem>>, vector<1x8x80xf32>,
    return
  }
  func.func @transform_0(%arg0: i32) -> (i32, i32, i32) {
    %c0_i32 = arith.constant 0 : i32
    %c0_i32_0 = arith.constant 0 : i32
    %c0_i32_1 = arith.constant 0 : i32
    return %arg0, %c0_i32, %c0_i32_0 : i32, i32, i32
  }
  func.func @transform_1(%arg0: i32) -> (i32, i32, i32) {
    %c0_i32 = arith.constant 0 : i32
    %c0_i32_0 = arith.constant 0 : i32
    %c0_i32_1 = arith.constant 0 : i32
    %c0_i32_2 = arith.constant 0 : i32
    return %c0_i32, %c0_i32_0, %c0_i32_1 : i32, i32, i32
  }
  func.func @transform_2(%arg0: i32) -> (i32, i32) {
    %c0_i32 = arith.constant 0 : i32
    %c0_i32_0 = arith.constant 0 : i32
    %c0_i32_1 = arith.constant 0 : i32
    return %c0_i32, %c0_i32_0 : i32, i32
  }
  func.func @transform_3(%arg0: i32) -> (i32, i32) {
    %c0_i32 = arith.constant 0 : i32
    %c0_i32_0 = arith.constant 0 : i32
    %c0_i32_1 = arith.constant 0 : i32
    return %c0_i32, %c0_i32_0 : i32, i32
  }
  func.func @transform_4(%arg0: i32) -> (i32, i32, i32) {
    %c0_i32 = arith.constant 0 : i32
    %c0_i32_0 = arith.constant 0 : i32
    %c0_i32_1 = arith.constant 0 : i32
    %c0_i32_2 = arith.constant 0 : i32
    return %c0_i32, %c0_i32_0, %c0_i32_1 : i32, i32, i32
  }
  func.func @transform_5(%arg0: i32) -> (i32, i32) {
    %c0_i32 = arith.constant 0 : i32
    %c0_i32_0 = arith.constant 0 : i32
    %c0_i32_1 = arith.constant 0 : i32
    return %c0_i32, %c0_i32_0 : i32, i32
  }
  func.func @transform_6(%arg0: i32) -> (i32, i32) {
    %c0_i32 = arith.constant 0 : i32
    %c0_i32_0 = arith.constant 0 : i32
    %c0_i32_1 = arith.constant 0 : i32
    return %c0_i32, %c0_i32_0 : i32, i32
  }
  func.func @transform_7(%arg0: i32) -> (i32, i32, i32) {
    %c0_i32 = arith.constant 0 : i32
    %c0_i32_0 = arith.constant 0 : i32
    %c0_i32_1 = arith.constant 0 : i32
    return %arg0, %c0_i32, %c0_i32_0 : i32, i32, i32
  }
}

</mosaic_0001>

<llo_original>
// kernel: tpu_custom_call.1
$region0: #{tpu_custom_call.1}
  #allocation0 [shape = 'u32[]', space=smem, size = 0x4, offset = 0x4, fixed_abs, tag = 'smem constant byte address 0x4 - core index']
  #allocation1 [shape = 'u32[144,128]{1,0:T(1,128)}', space=vmem, size = 0x12000, scoped, tag = 'internal scratch']
  #allocation2 [shape = 'bf16[8,110]{1,0:T(8,128)(2,1)}', space=vmem, size = 0x800, scoped, tag = 'scratch operand']
  %s0 = inlined_call_operand.vmem [shape: bf16[2,4,520], index: 0, kind: input, shape index: {}]
  %s1 = inlined_call_operand.vmem [shape: bf16[9,8,4], index: 1, kind: input, shape index: {}]
  %s2 = inlined_call_operand.vmem [shape: f32[8,1], index: 2, kind: input, shape index: {}]
  %s3 = inlined_call_operand.vmem [shape: f32[1,110], index: 3, kind: input, shape index: {}]
  %s4 = inlined_call_operand.vmem [shape: bf16[9,8,8], index: 4, kind: input, shape index: {}]
  %s5 = inlined_call_operand.vmem [shape: f32[8,1], index: 5, kind: input, shape index: {}]
  %s6 = inlined_call_operand.vmem [shape: bf16[8,4], index: 6, kind: input, shape index: {}]
  %s7 = inlined_call_operand.hbm [shape: f32[2,8,80], index: 7, kind: output, shape index: {}]
  %s8 = sld [smem:[#allocation0]]
  $region61: #{tpu_custom_call.1} parent=0
    _
  %s10 = ssub.s32 1, %s8
  %s11 = scalar_select 0, %s10, %s8
  $region1: #{tpu_custom_call.1} parent=0
    #allocation3 [shape = 'u8[8192]{0}', space=vmem, size = 0x2000, scoped, tag = 'output window, operand 0']
    #allocation4 [shape = 's32[2]{0}', space=sflag, size = 0x8, scoped, tag = 'scoped memory for tpu_custom_call.1']
    %12 = vsyncpa [#allocation4], 0
    %s13 = scalar_lea.sflag [#allocation4], 1
    %14 = vsyncpa %s13, 0
    loop: start=0, step=1, limit=4
    $region2: #{tpu_custom_call.1} parent=1 // loop_pre_header
      _
    $region3: #{tpu_custom_call.1} parent=1 // loop_header
      %s16 = sphi 0, %s20
      %p17 = scmp.ge.s32.totalorder %s16, 4
      %s26 = sphi 0, %s28
      %s29 = sphi 0, %s26
      %s30 = sphi 0, %s29
      %s46 = sphi 0, %s30
      %s50 = sphi 0, %s50
      %s52 = sphi 0, %s50
      %s53 = sphi 0, %s52
      %s67 = sphi 0, %s53
      %s71 = sphi 0, %s71
      %s73 = sphi 0, %s71
      %s74 = sphi 0, %s73
      %s88 = sphi 0, %s74
      %s92 = sphi 0, %s92
      %s94 = sphi 0, %s92
      %s95 = sphi 0, %s94
      %s109 = sphi 0, %s95
      %s113 = sphi 0, %s113
      %s115 = sphi 0, %s113
      %s116 = sphi 0, %s115
      %s130 = sphi 0, %s116
      %s134 = sphi 0, %s134
      %s136 = sphi 0, %s134
      %s137 = sphi 0, %s136
      %s151 = sphi 0, %s137
      %s155 = sphi 0, %s155
      %s157 = sphi 0, %s155
      %s158 = sphi 0, %s157
      %s172 = sphi 0, %s158
      %s178 = sphi 0, %s180
      %s181 = sphi 0, %s178
      %s182 = sphi 0, %s181
      %s198 = sphi 0, %s182
    $region4: #{tpu_custom_call.1} parent=1 // loop_header_branch
      %19 = sbr.rel (%p17) target = $region8
    $region5: #{tpu_custom_call.1} parent=1 // loop_body
      %s21 = ssub.s32 %s16, 1
      %s22 = ssub.s32 %s16, 2
      %s23 = sadd.s32 %s16, 1
      %s24 = ssub.s32 %s16, %s23
      %p25 = scmp.eq.s32.totalorder %s24, 0
      %s27 = sadd.s32 %s26, 1
      %s28 = scalar_select %p25, %s26, %s27
      %p31 = pneg %p25
      %p32 = scmp.eq.s32.totalorder %s16, 1
      %p33 = por %p31, %p32
      %p34 = scmp.ne.s32.totalorder %s26, %s29
      %p35 = scmp.eq.s32.totalorder %s16, 0
      %p36 = por %p34, %p35
      %p37 = scmp.ne.s32.totalorder %s26, %s29
      %p38 = scmp.eq.s32.totalorder %s21, 1
      %p39 = por %p37, %p38
      %p40 = scmp.ne.s32.totalorder %s29, %s30
      %p41 = scmp.eq.s32.totalorder %s21, 0
      %p42 = por %p40, %p41
      %p43 = scmp.ne.s32.totalorder %s29, %s30
      %p44 = scmp.eq.s32.totalorder %s22, 1
      %p45 = por %p43, %p44
      %p47 = scmp.ne.s32.totalorder %s30, %s46
      %p48 = scmp.eq.s32.totalorder %s22, 0
      %p49 = por %p47, %p48
      %s51 = sadd.s32 %s50, 1
      %p54 = scmp.eq.s32.totalorder %s16, 1
      %p55 = scmp.ne.s32.totalorder %s50, %s52
      %p56 = scmp.eq.s32.totalorder %s16, 0
      %p57 = por %p55, %p56
      %p58 = scmp.ne.s32.totalorder %s50, %s52
      %p59 = scmp.eq.s32.totalorder %s21, 1
      %p60 = por %p58, %p59
      %p61 = scmp.ne.s32.totalorder %s52, %s53
      %p62 = scmp.eq.s32.totalorder %s21, 0
      %p63 = por %p61, %p62
      %p64 = scmp.ne.s32.totalorder %s52, %s53
      %p65 = scmp.eq.s32.totalorder %s22, 1
      %p66 = por %p64, %p65
      %p68 = scmp.ne.s32.totalorder %s53, %s67
      %p69 = scmp.eq.s32.totalorder %s22, 0
      %p70 = por %p68, %p69
      %s72 = sadd.s32 %s71, 1
      %p75 = scmp.eq.s32.totalorder %s16, 1
      %p76 = scmp.ne.s32.totalorder %s71, %s73
      %p77 = scmp.eq.s32.totalorder %s16, 0
      %p78 = por %p76, %p77
      %p79 = scmp.ne.s32.totalorder %s71, %s73
      %p80 = scmp.eq.s32.totalorder %s21, 1
      %p81 = por %p79, %p80
      %p82 = scmp.ne.s32.totalorder %s73, %s74
      %p83 = scmp.eq.s32.totalorder %s21, 0
      %p84 = por %p82, %p83
      %p85 = scmp.ne.s32.totalorder %s73, %s74
      %p86 = scmp.eq.s32.totalorder %s22, 1
      %p87 = por %p85, %p86
      %p89 = scmp.ne.s32.totalorder %s74, %s88
      %p90 = scmp.eq.s32.totalorder %s22, 0
      %p91 = por %p89, %p90
      %s93 = sadd.s32 %s92, 1
      %p96 = scmp.eq.s32.totalorder %s16, 1
      %p97 = scmp.ne.s32.totalorder %s92, %s94
      %p98 = scmp.eq.s32.totalorder %s16, 0
      %p99 = por %p97, %p98
      %p100 = scmp.ne.s32.totalorder %s92, %s94
      %p101 = scmp.eq.s32.totalorder %s21, 1
      %p102 = por %p100, %p101
      %p103 = scmp.ne.s32.totalorder %s94, %s95
      %p104 = scmp.eq.s32.totalorder %s21, 0
      %p105 = por %p103, %p104
      %p106 = scmp.ne.s32.totalorder %s94, %s95
      %p107 = scmp.eq.s32.totalorder %s22, 1
      %p108 = por %p106, %p107
      %p110 = scmp.ne.s32.totalorder %s95, %s109
      %p111 = scmp.eq.s32.totalorder %s22, 0
      %p112 = por %p110, %p111
      %s114 = sadd.s32 %s113, 1
      %p117 = scmp.eq.s32.totalorder %s16, 1
      %p118 = scmp.ne.s32.totalorder %s113, %s115
      %p119 = scmp.eq.s32.totalorder %s16, 0
      %p120 = por %p118, %p119
      %p121 = scmp.ne.s32.totalorder %s113, %s115
      %p122 = scmp.eq.s32.totalorder %s21, 1
      %p123 = por %p121, %p122
      %p124 = scmp.ne.s32.totalorder %s115, %s116
      %p125 = scmp.eq.s32.totalorder %s21, 0
      %p126 = por %p124, %p125
      %p127 = scmp.ne.s32.totalorder %s115, %s116
      %p128 = scmp.eq.s32.totalorder %s22, 1
      %p129 = por %p127, %p128
      %p131 = scmp.ne.s32.totalorder %s116, %s130
      %p132 = scmp.eq.s32.totalorder %s22, 0
      %p133 = por %p131, %p132
      %s135 = sadd.s32 %s134, 1
      %p138 = scmp.eq.s32.totalorder %s16, 1
      %p139 = scmp.ne.s32.totalorder %s134, %s136
      %p140 = scmp.eq.s32.totalorder %s16, 0
      %p141 = por %p139, %p140
      %p142 = scmp.ne.s32.totalorder %s134, %s136
      %p143 = scmp.eq.s32.totalorder %s21, 1
      %p144 = por %p142, %p143
      %p145 = scmp.ne.s32.totalorder %s136, %s137
      %p146 = scmp.eq.s32.totalorder %s21, 0
      %p147 = por %p145, %p146
      %p148 = scmp.ne.s32.totalorder %s136, %s137
      %p149 = scmp.eq.s32.totalorder %s22, 1
      %p150 = por %p148, %p149
      %p152 = scmp.ne.s32.totalorder %s137, %s151
      %p153 = scmp.eq.s32.totalorder %s22, 0
      %p154 = por %p152, %p153
      %s156 = sadd.s32 %s155, 1
      %p159 = scmp.eq.s32.totalorder %s16, 1
      %p160 = scmp.ne.s32.totalorder %s155, %s157
      %p161 = scmp.eq.s32.totalorder %s16, 0
      %p162 = por %p160, %p161
      %p163 = scmp.ne.s32.totalorder %s155, %s157
      %p164 = scmp.eq.s32.totalorder %s21, 1
      %p165 = por %p163, %p164
      %p166 = scmp.ne.s32.totalorder %s157, %s158
      %p167 = scmp.eq.s32.totalorder %s21, 0
      %p168 = por %p166, %p167
      %p169 = scmp.ne.s32.totalorder %s157, %s158
      %p170 = scmp.eq.s32.totalorder %s22, 1
      %p171 = por %p169, %p170
      %p173 = scmp.ne.s32.totalorder %s158, %s172
      %p174 = scmp.eq.s32.totalorder %s22, 0
      %p175 = por %p173, %p174
      %s176 = ssub.s32 %s16, %s23
      %p177 = scmp.eq.s32.totalorder %s176, 0
      %s179 = sadd.s32 %s178, 1
      %s180 = scalar_select %p177, %s178, %s179
      %p183 = pneg %p177
      %p184 = scmp.eq.s32.totalorder %s16, 1
      %p185 = por %p183, %p184
      %p186 = scmp.ne.s32.totalorder %s178, %s181
      %p187 = scmp.eq.s32.totalorder %s16, 0
      %p188 = por %p186, %p187
      %p189 = scmp.ne.s32.totalorder %s178, %s181
      %p190 = scmp.eq.s32.totalorder %s21, 1
      %p191 = por %p189, %p190
      %p192 = scmp.ne.s32.totalorder %s181, %s182
      %p193 = scmp.eq.s32.totalorder %s21, 0
      %p194 = por %p192, %p193
      %p195 = scmp.ne.s32.totalorder %s181, %s182
      %p196 = scmp.eq.s32.totalorder %s22, 1
      %p197 = por %p195, %p196
      %p199 = scmp.ne.s32.totalorder %s182, %s198
      %p200 = scmp.eq.s32.totalorder %s22, 0
      %p201 = por %p199, %p200
      %p202 = scmp.le.s32.totalorder 1, %s16
      %p203 = scmp.lt.s32.totalorder %s16, 3
      %p204 = pnand %p202, %p203
      %p205 = pneg %p204
      // Predicated region
      $region9: #{tpu_custom_call.1} parent=5 // pred_check
        _
      $region10: #{tpu_custom_call.1} parent=5 // pred_check_branch
        %207 = sbr.rel (%p204) target = $region12
      $region11: #{tpu_custom_call.1} parent=5 // pred_region
        %s208 = ssub.s32 %s16, 1
        // Predicated region
        $region13: #{tpu_custom_call.1} parent=11 // pred_check
          %p209 = pneg %p63
        $region14: #{tpu_custom_call.1} parent=11 // pred_check_branch
          %211 = sbr.rel (%p209) target = $region16
        $region15: #{tpu_custom_call.1} parent=11 // pred_region
          _
        $region16: #{tpu_custom_call.1} parent=11 // pred_fallthru
          _
        // Predicated region
        $region17: #{tpu_custom_call.1} parent=11 // pred_check
          %p212 = pneg %p84
        $region18: #{tpu_custom_call.1} parent=11 // pred_check_branch
          %214 = sbr.rel (%p212) target = $region20
        $region19: #{tpu_custom_call.1} parent=11 // pred_region
          _
        $region20: #{tpu_custom_call.1} parent=11 // pred_fallthru
          _
        // Predicated region
        $region21: #{tpu_custom_call.1} parent=11 // pred_check
          %p215 = pneg %p105
        $region22: #{tpu_custom_call.1} parent=11 // pred_check_branch
          %217 = sbr.rel (%p215) target = $region24
        $region23: #{tpu_custom_call.1} parent=11 // pred_region
          _
        $region24: #{tpu_custom_call.1} parent=11 // pred_fallthru
          _
        // Predicated region
        $region25: #{tpu_custom_call.1} parent=11 // pred_check
          %p218 = pneg %p126
        $region26: #{tpu_custom_call.1} parent=11 // pred_check_branch
          %220 = sbr.rel (%p218) target = $region28
        $region27: #{tpu_custom_call.1} parent=11 // pred_region
          _
        $region28: #{tpu_custom_call.1} parent=11 // pred_fallthru
          _
        // Predicated region
        $region29: #{tpu_custom_call.1} parent=11 // pred_check
          %p221 = pneg %p147
        $region30: #{tpu_custom_call.1} parent=11 // pred_check_branch
          %223 = sbr.rel (%p221) target = $region32
        $region31: #{tpu_custom_call.1} parent=11 // pred_region
          _
        $region32: #{tpu_custom_call.1} parent=11 // pred_fallthru
          _
        // Predicated region
        $region33: #{tpu_custom_call.1} parent=11 // pred_check
          %p224 = pneg %p168
        $region34: #{tpu_custom_call.1} parent=11 // pred_check_branch
          %226 = sbr.rel (%p224) target = $region36
        $region35: #{tpu_custom_call.1} parent=11 // pred_region
          _
        $region36: #{tpu_custom_call.1} parent=11 // pred_fallthru
          _
      $region12: #{tpu_custom_call.1} parent=5 // pred_fallthru
        _
      %p227 = scmp.lt.s32.totalorder %s16, 2
      // Predicated region
      $region37: #{tpu_custom_call.1} parent=5 // pred_check
        %p228 = pneg %p227
      $region38: #{tpu_custom_call.1} parent=5 // pred_check_branch
        %230 = sbr.rel (%p228) target = $region40
      $region39: #{tpu_custom_call.1} parent=5 // pred_region
        // Predicated region
        $region41: #{tpu_custom_call.1} parent=39 // pred_check
          %p231 = pneg %p36
        $region42: #{tpu_custom_call.1} parent=39 // pred_check_branch
          %233 = sbr.rel (%p231) target = $region44
        $region43: #{tpu_custom_call.1} parent=39 // pred_region
          %p234 = scmp.lt.s32.totalorder %s16, 1
          %s235 = scalar_select %p234, %s16, 1
          %s236 = smul.addr %s235, 5
          %s237 = smul.addr %s236, 2
          %s238 = scalar_lea.vmem %s0, %s237
        $region44: #{tpu_custom_call.1} parent=39 // pred_fallthru
          _
      $region40: #{tpu_custom_call.1} parent=5 // pred_fallthru
        _
      %p239 = scmp.le.s32.totalorder 1, %s16
      %p240 = scmp.lt.s32.totalorder %s16, 3
      %p241 = pnand %p239, %p240
      %p242 = pneg %p241
      // Predicated region
      $region45: #{tpu_custom_call.1} parent=5 // pred_check
        _
      $region46: #{tpu_custom_call.1} parent=5 // pred_check_branch
        %244 = sbr.rel (%p241) target = $region48
      $region47: #{tpu_custom_call.1} parent=5 // pred_region
        %s245 = ssub.s32 %s16, 1
        %p246 = scmp.lt.s32.totalorder %s21, 1
        %s247 = scalar_select %p246, %s21, 1
        %s248 = smul.addr %s247, 5
        %s249 = smul.addr %s248, 2
        %s250 = scalar_lea.vmem %s0, %s249
        %p251 = pneg %p42
        %p252 = pneg %p39
        %p253 = pneg %p63
        %p254 = pneg %p60
        %p255 = pneg %p84
        %p256 = pneg %p81
        %p257 = pneg %p105
        %p258 = pneg %p102
        %p259 = pneg %p126
        %p260 = pneg %p123
        %p261 = pneg %p147
        %p262 = pneg %p144
        %p263 = pneg %p168
        %p264 = pneg %p165
        %p265 = pneg %p194
        %p266 = pneg %p191
        %s267 = sand.u32 %s181, 1
        %s268 = scalar_lea.sflag [#allocation4], %s267
        %s269 = sand.u32 %s181, 1
        %s270 = smul.addr %s269, 8
        %s271 = scalar_lea.vmem [#allocation3], %s270
        %p272 = scmp.lt.s32.totalorder %s21, 1
        %s273 = scalar_select %p272, %s21, 1
        %s274 = smul.addr %s273, 5
        %s275 = smul.addr %s274, 2
        %s276 = scalar_lea.vmem %s0, %s275
        %v278 = vld [vmem:[%s276] sm:$0x3]
        %v279 = vld [vmem:[%s1] sm:$0xf]
        %v280 = vld [vmem:[%s276 + $0x2] sm:$0x3]
        %s281 = scalar_lea.vmem %s1, 4
        %v282 = vld [vmem:[%s281] sm:$0xf]
        %v285 = vunpack.c.l.s4 1983009808
        %v286 = vunpack.c.0.s8 %v285
        %v287 = vlaneseq
        %v288 = vshrl.u32 %v287, 7
        %v289 = vsub.s32 %v286, %v288
        %v290 = vrot.slane %v280, %v289
        %291 = vrot.lane.b32.xlu0 %v290, 126
        %v292 = vpop.permute.xlu0 %291
        %vm293 = vcmask 31744
        %v295 = vsel %vm293, %v282, 0
        %vm297 = vcmask 1041408
        %v299 = vsel %vm297, %v292, 0
        %301 = vmatprep.subr.bf16.mxu0 0
        %302 = vmatpush1.bf16.msra.mxu0 0
        %303 = vmatprep.subr.bf16.mxu0 0
        %304 = vmatpush1.bf16.msra.mxu0 0
        %305 = vmatprep.subr.bf16.mxu0 0
        %306 = vmatpush1.bf16.msra.mxu0 0
        %307 = vmatprep.subr.bf16.mxu0 0
        %308 = vmatpush1.bf16.msra.mxu0 0
        %309 = vmatprep.subr.bf16.mxu0 0
        %310 = vmatpush1.bf16.msra.mxu0 0
        %311 = vmatprep.subr.bf16.mxu0 0
        %312 = vmatpush1.bf16.msra.mxu0 0
        %313 = vmatprep.subr.bf16.mxu0 0
        %314 = vmatpush1.bf16.msra.mxu0 0
        %315 = vmatprep.subr.bf16.mxu0 0
        %316 = vmatpush1.bf16.msra.mxu0 %v299
        %317 = vmatprep.subr.bf16.mxu0 0
        %318 = vmatpush2.bf16.msra.mxu0 0
        %319 = vmatprep.subr.bf16.mxu0 0
        %320 = vmatpush2.bf16.msra.mxu0 0
        %321 = vmatprep.subr.bf16.mxu0 0
        %322 = vmatpush2.bf16.msra.mxu0 0
        %323 = vmatprep.subr.bf16.mxu0 0
        %324 = vmatpush2.bf16.msra.mxu0 0
        %325 = vmatprep.subr.bf16.mxu0 0
        %326 = vmatpush2.bf16.msra.mxu0 0
        %327 = vmatprep.subr.bf16.mxu0 0
        %328 = vmatpush2.bf16.msra.mxu0 0
        %329 = vmatprep.subr.bf16.mxu0 0
        %330 = vmatpush2.bf16.msra.mxu0 0
        %331 = vmatprep.subr.bf16.mxu0 0
        %332 = vmatpush2.bf16.msra.mxu0 0
        %333 = vmatprep.mubr.bf16.mxu0 0
        %334 = vmatmul.mubr.bf16.gmra.mxu0 %v295
        %v335 = vpop.f32.mrf.mxu0
        %v336 = vadd.f32 0.0, %v335
        %v337 = vpop.f32.mrf.mxu0
        %v338 = vpop.f32.mrf.mxu0
        %v339 = vpop.f32.mrf.mxu0
        %340 = vdwg.mxu0
        %v342 = vsel %vm293, %v279, 0
        %v345 = vsel %vm297, %v278, 0
        %347 = vmatprep.subr.bf16.mxu0 0
        %348 = vmatpush1.bf16.msra.mxu0 0
        %349 = vmatprep.subr.bf16.mxu0 0
        %350 = vmatpush1.bf16.msra.mxu0 0
        %351 = vmatprep.subr.bf16.mxu0 0
        %352 = vmatpush1.bf16.msra.mxu0 0
        %353 = vmatprep.subr.bf16.mxu0 0
        %354 = vmatpush1.bf16.msra.mxu0 0
        %355 = vmatprep.subr.bf16.mxu0 0
        %356 = vmatpush1.bf16.msra.mxu0 0
        %357 = vmatprep.subr.bf16.mxu0 0
        %358 = vmatpush1.bf16.msra.mxu0 0
        %359 = vmatprep.subr.bf16.mxu0 0
        %360 = vmatpush1.bf16.msra.mxu0 0
        %361 = vmatprep.subr.bf16.mxu0 0
        %362 = vmatpush1.bf16.msra.mxu0 %v345
        %363 = vmatprep.subr.bf16.mxu0 0
        %364 = vmatpush2.bf16.msra.mxu0 0
        %365 = vmatprep.subr.bf16.mxu0 0
        %366 = vmatpush2.bf16.msra.mxu0 0
        %367 = vmatprep.subr.bf16.mxu0 0
        %368 = vmatpush2.bf16.msra.mxu0 0
        %369 = vmatprep.subr.bf16.mxu0 0
        %370 = vmatpush2.bf16.msra.mxu0 0
        %371 = vmatprep.subr.bf16.mxu0 0
        %372 = vmatpush2.bf16.msra.mxu0 0
        %373 = vmatprep.subr.bf16.mxu0 0
        %374 = vmatpush2.bf16.msra.mxu0 0
        %375 = vmatprep.subr.bf16.mxu0 0
        %376 = vmatpush2.bf16.msra.mxu0 0
        %377 = vmatprep.subr.bf16.mxu0 0
        %378 = vmatpush2.bf16.msra.mxu0 0
        %379 = vmatprep.mubr.bf16.mxu0 0
        %380 = vmatmul.mubr.bf16.gmra.mxu0 %v342
        %v381 = vpop.f32.mrf.mxu0
        %v382 = vadd.f32 %v336, %v381
        %v383 = vpop.f32.mrf.mxu0
        %v384 = vpop.f32.mrf.mxu0
        %v385 = vpop.f32.mrf.mxu0
        %386 = vdwg.mxu0
        %v387 = vld [vmem:[%s276] sm:$0x3]
        %s388 = scalar_lea.vmem %s1, 8
        %v389 = vld [vmem:[%s388] sm:$0xf]
        %v392 = vunpack.c.l.s4 1983009808
        %v393 = vunpack.c.0.s8 %v392
        %v394 = vlaneseq
        %v395 = vshrl.u32 %v394, 7
        %v396 = vsub.s32 %v393, %v395
        %v397 = vrot.slane %v387, %v396
        %398 = vrot.lane.b32.xlu0 %v397, 127
        %v399 = vpop.permute.xlu0 %398
        %v401 = vsel %vm293, %v389, 0
        %v404 = vsel %vm297, %v399, 0
        %406 = vmatprep.subr.bf16.mxu0 0
        %407 = vmatpush1.bf16.msra.mxu0 0
        %408 = vmatprep.subr.bf16.mxu0 0
        %409 = vmatpush1.bf16.msra.mxu0 0
        %410 = vmatprep.subr.bf16.mxu0 0
        %411 = vmatpush1.bf16.msra.mxu0 0
        %412 = vmatprep.subr.bf16.mxu0 0
        %413 = vmatpush1.bf16.msra.mxu0 0
        %414 = vmatprep.subr.bf16.mxu0 0
        %415 = vmatpush1.bf16.msra.mxu0 0
        %416 = vmatprep.subr.bf16.mxu0 0
        %417 = vmatpush1.bf16.msra.mxu0 0
        %418 = vmatprep.subr.bf16.mxu0 0
        %419 = vmatpush1.bf16.msra.mxu0 0
        %420 = vmatprep.subr.bf16.mxu0 0
        %421 = vmatpush1.bf16.msra.mxu0 %v404
        %422 = vmatprep.subr.bf16.mxu0 0
        %423 = vmatpush2.bf16.msra.mxu0 0
        %424 = vmatprep.subr.bf16.mxu0 0
        %425 = vmatpush2.bf16.msra.mxu0 0
        %426 = vmatprep.subr.bf16.mxu0 0
        %427 = vmatpush2.bf16.msra.mxu0 0
        %428 = vmatprep.subr.bf16.mxu0 0
        %429 = vmatpush2.bf16.msra.mxu0 0
        %430 = vmatprep.subr.bf16.mxu0 0
        %431 = vmatpush2.bf16.msra.mxu0 0
        %432 = vmatprep.subr.bf16.mxu0 0
        %433 = vmatpush2.bf16.msra.mxu0 0
        %434 = vmatprep.subr.bf16.mxu0 0
        %435 = vmatpush2.bf16.msra.mxu0 0
        %436 = vmatprep.subr.bf16.mxu0 0
        %437 = vmatpush2.bf16.msra.mxu0 0
        %438 = vmatprep.mubr.bf16.mxu0 0
        %439 = vmatmul.mubr.bf16.gmra.mxu0 %v401
        %v440 = vpop.f32.mrf.mxu0
        %v441 = vadd.f32 0.0, %v440
        %v442 = vpop.f32.mrf.mxu0
        %v443 = vpop.f32.mrf.mxu0
        %v444 = vpop.f32.mrf.mxu0
        %445 = vdwg.mxu0
        %v446 = vadd.f32 %v382, %v441
        %v447 = vld [vmem:[%s276 + $0x4] sm:$0x3]
        %s448 = scalar_lea.vmem %s1, 12
        %v449 = vld [vmem:[%s448] sm:$0xf]
        %v452 = vunpack.c.l.s4 1983009808
        %v453 = vunpack.c.0.s8 %v452
        %v454 = vlaneseq
        %v455 = vshrl.u32 %v454, 7
        %v456 = vsub.s32 %v453, %v455
        %v457 = vrot.slane %v447, %v456
        %458 = vrot.lane.b32.xlu0 %v457, 124
        %v459 = vpop.permute.xlu0 %458
        %v461 = vsel %vm293, %v449, 0
        %v464 = vsel %vm297, %v459, 0
        %466 = vmatprep.subr.bf16.mxu0 0
        %467 = vmatpush1.bf16.msra.mxu0 0
        %468 = vmatprep.subr.bf16.mxu0 0
        %469 = vmatpush1.bf16.msra.mxu0 0
        %470 = vmatprep.subr.bf16.mxu0 0
        %471 = vmatpush1.bf16.msra.mxu0 0
        %472 = vmatprep.subr.bf16.mxu0 0
        %473 = vmatpush1.bf16.msra.mxu0 0
        %474 = vmatprep.subr.bf16.mxu0 0
        %475 = vmatpush1.bf16.msra.mxu0 0
        %476 = vmatprep.subr.bf16.mxu0 0
        %477 = vmatpush1.bf16.msra.mxu0 0
        %478 = vmatprep.subr.bf16.mxu0 0
        %479 = vmatpush1.bf16.msra.mxu0 0
        %480 = vmatprep.subr.bf16.mxu0 0
        %481 = vmatpush1.bf16.msra.mxu0 %v464
        %482 = vmatprep.subr.bf16.mxu0 0
        %483 = vmatpush2.bf16.msra.mxu0 0
        %484 = vmatprep.subr.bf16.mxu0 0
        %485 = vmatpush2.bf16.msra.mxu0 0
        %486 = vmatprep.subr.bf16.mxu0 0
        %487 = vmatpush2.bf16.msra.mxu0 0
        %488 = vmatprep.subr.bf16.mxu0 0
        %489 = vmatpush2.bf16.msra.mxu0 0
        %490 = vmatprep.subr.bf16.mxu0 0
        %491 = vmatpush2.bf16.msra.mxu0 0
        %492 = vmatprep.subr.bf16.mxu0 0
        %493 = vmatpush2.bf16.msra.mxu0 0
        %494 = vmatprep.subr.bf16.mxu0 0
        %495 = vmatpush2.bf16.msra.mxu0 0
        %496 = vmatprep.subr.bf16.mxu0 0
        %497 = vmatpush2.bf16.msra.mxu0 0
        %498 = vmatprep.mubr.bf16.mxu0 0
        %499 = vmatmul.mubr.bf16.gmra.mxu0 %v461
        %v500 = vpop.f32.mrf.mxu0
        %v501 = vadd.f32 0.0, %v500
        %v502 = vpop.f32.mrf.mxu0
        %v503 = vpop.f32.mrf.mxu0
        %v504 = vpop.f32.mrf.mxu0
        %505 = vdwg.mxu0
        %v506 = vadd.f32 %v446, %v501
        %v507 = vld [vmem:[%s276 + $0x6] sm:$0x3]
        %s508 = scalar_lea.vmem %s1, 16
        %v509 = vld [vmem:[%s508] sm:$0xf]
        %v512 = vunpack.c.l.s4 1983009808
        %v513 = vunpack.c.0.s8 %v512
        %v514 = vlaneseq
        %v515 = vshrl.u32 %v514, 7
        %v516 = vsub.s32 %v513, %v515
        %v517 = vrot.slane %v507, %v516
        %518 = vrot.lane.b32.xlu0 %v517, 122
        %v519 = vpop.permute.xlu0 %518
        %v521 = vsel %vm293, %v509, 0
        %v524 = vsel %vm297, %v519, 0
        %526 = vmatprep.subr.bf16.mxu0 0
        %527 = vmatpush1.bf16.msra.mxu0 0
        %528 = vmatprep.subr.bf16.mxu0 0
        %529 = vmatpush1.bf16.msra.mxu0 0
        %530 = vmatprep.subr.bf16.mxu0 0
        %531 = vmatpush1.bf16.msra.mxu0 0
        %532 = vmatprep.subr.bf16.mxu0 0
        %533 = vmatpush1.bf16.msra.mxu0 0
        %534 = vmatprep.subr.bf16.mxu0 0
        %535 = vmatpush1.bf16.msra.mxu0 0
        %536 = vmatprep.subr.bf16.mxu0 0
        %537 = vmatpush1.bf16.msra.mxu0 0
        %538 = vmatprep.subr.bf16.mxu0 0
        %539 = vmatpush1.bf16.msra.mxu0 0
        %540 = vmatprep.subr.bf16.mxu0 0
        %541 = vmatpush1.bf16.msra.mxu0 %v524
        %542 = vmatprep.subr.bf16.mxu0 0
        %543 = vmatpush2.bf16.msra.mxu0 0
        %544 = vmatprep.subr.bf16.mxu0 0
        %545 = vmatpush2.bf16.msra.mxu0 0
        %546 = vmatprep.subr.bf16.mxu0 0
        %547 = vmatpush2.bf16.msra.mxu0 0
        %548 = vmatprep.subr.bf16.mxu0 0
        %549 = vmatpush2.bf16.msra.mxu0 0
        %550 = vmatprep.subr.bf16.mxu0 0
        %551 = vmatpush2.bf16.msra.mxu0 0
        %552 = vmatprep.subr.bf16.mxu0 0
        %553 = vmatpush2.bf16.msra.mxu0 0
        %554 = vmatprep.subr.bf16.mxu0 0
        %555 = vmatpush2.bf16.msra.mxu0 0
        %556 = vmatprep.subr.bf16.mxu0 0
        %557 = vmatpush2.bf16.msra.mxu0 0
        %558 = vmatprep.mubr.bf16.mxu0 0
        %559 = vmatmul.mubr.bf16.gmra.mxu0 %v521
        %v560 = vpop.f32.mrf.mxu0
        %v561 = vadd.f32 0.0, %v560
        %v562 = vpop.f32.mrf.mxu0
        %v563 = vpop.f32.mrf.mxu0
        %v564 = vpop.f32.mrf.mxu0
        %565 = vdwg.mxu0
        %v566 = vadd.f32 %v506, %v561
        %v567 = vld [vmem:[%s276 + $0x4] sm:$0x3]
        %s568 = scalar_lea.vmem %s1, 20
        %v569 = vld [vmem:[%s568] sm:$0xf]
        %v572 = vunpack.c.l.s4 1983009808
        %v573 = vunpack.c.0.s8 %v572
        %v574 = vlaneseq
        %v575 = vshrl.u32 %v574, 7
        %v576 = vsub.s32 %v573, %v575
        %v577 = vrot.slane %v567, %v576
        %578 = vrot.lane.b32.xlu0 %v577, 123
        %v579 = vpop.permute.xlu0 %578
        %v581 = vsel %vm293, %v569, 0
        %v584 = vsel %vm297, %v579, 0
        %586 = vmatprep.subr.bf16.mxu0 0
        %587 = vmatpush1.bf16.msra.mxu0 0
        %588 = vmatprep.subr.bf16.mxu0 0
        %589 = vmatpush1.bf16.msra.mxu0 0
        %590 = vmatprep.subr.bf16.mxu0 0
        %591 = vmatpush1.bf16.msra.mxu0 0
        %592 = vmatprep.subr.bf16.mxu0 0
        %593 = vmatpush1.bf16.msra.mxu0 0
        %594 = vmatprep.subr.bf16.mxu0 0
        %595 = vmatpush1.bf16.msra.mxu0 0
        %596 = vmatprep.subr.bf16.mxu0 0
        %597 = vmatpush1.bf16.msra.mxu0 0
        %598 = vmatprep.subr.bf16.mxu0 0
        %599 = vmatpush1.bf16.msra.mxu0 0
        %600 = vmatprep.subr.bf16.mxu0 0
        %601 = vmatpush1.bf16.msra.mxu0 %v584
        %602 = vmatprep.subr.bf16.mxu0 0
        %603 = vmatpush2.bf16.msra.mxu0 0
        %604 = vmatprep.subr.bf16.mxu0 0
        %605 = vmatpush2.bf16.msra.mxu0 0
        %606 = vmatprep.subr.bf16.mxu0 0
        %607 = vmatpush2.bf16.msra.mxu0 0
        %608 = vmatprep.subr.bf16.mxu0 0
        %609 = vmatpush2.bf16.msra.mxu0 0
        %610 = vmatprep.subr.bf16.mxu0 0
        %611 = vmatpush2.bf16.msra.mxu0 0
        %612 = vmatprep.subr.bf16.mxu0 0
        %613 = vmatpush2.bf16.msra.mxu0 0
        %614 = vmatprep.subr.bf16.mxu0 0
        %615 = vmatpush2.bf16.msra.mxu0 0
        %616 = vmatprep.subr.bf16.mxu0 0
        %617 = vmatpush2.bf16.msra.mxu0 0
        %618 = vmatprep.mubr.bf16.mxu0 0
        %619 = vmatmul.mubr.bf16.gmra.mxu0 %v581
        %v620 = vpop.f32.mrf.mxu0
        %v621 = vadd.f32 0.0, %v620
        %v622 = vpop.f32.mrf.mxu0
        %v623 = vpop.f32.mrf.mxu0
        %v624 = vpop.f32.mrf.mxu0
        %625 = vdwg.mxu0
        %v626 = vadd.f32 %v566, %v621
        %v627 = vld [vmem:[%s276] sm:$0x3]
        %s628 = scalar_lea.vmem %s1, 24
        %v629 = vld [vmem:[%s628] sm:$0xf]
        %v632 = vunpack.c.l.s4 1983009808
        %v633 = vunpack.c.0.s8 %v632
        %v634 = vlaneseq
        %v635 = vshrl.u32 %v634, 7
        %v636 = vsub.s32 %v633, %v635
        %v637 = vrot.slane %v627, %v636
        %638 = vrot.lane.b32.xlu0 %v637, 118
        %v639 = vpop.permute.xlu0 %638
        %v641 = vsel %vm293, %v629, 0
        %v644 = vsel %vm297, %v639, 0
        %646 = vmatprep.subr.bf16.mxu0 0
        %647 = vmatpush1.bf16.msra.mxu0 0
        %648 = vmatprep.subr.bf16.mxu0 0
        %649 = vmatpush1.bf16.msra.mxu0 0
        %650 = vmatprep.subr.bf16.mxu0 0
        %651 = vmatpush1.bf16.msra.mxu0 0
        %652 = vmatprep.subr.bf16.mxu0 0
        %653 = vmatpush1.bf16.msra.mxu0 0
        %654 = vmatprep.subr.bf16.mxu0 0
        %655 = vmatpush1.bf16.msra.mxu0 0
        %656 = vmatprep.subr.bf16.mxu0 0
        %657 = vmatpush1.bf16.msra.mxu0 0
        %658 = vmatprep.subr.bf16.mxu0 0
        %659 = vmatpush1.bf16.msra.mxu0 0
        %660 = vmatprep.subr.bf16.mxu0 0
        %661 = vmatpush1.bf16.msra.mxu0 %v644
        %662 = vmatprep.subr.bf16.mxu0 0
        %663 = vmatpush2.bf16.msra.mxu0 0
        %664 = vmatprep.subr.bf16.mxu0 0
        %665 = vmatpush2.bf16.msra.mxu0 0
        %666 = vmatprep.subr.bf16.mxu0 0
        %667 = vmatpush2.bf16.msra.mxu0 0
        %668 = vmatprep.subr.bf16.mxu0 0
        %669 = vmatpush2.bf16.msra.mxu0 0
        %670 = vmatprep.subr.bf16.mxu0 0
        %671 = vmatpush2.bf16.msra.mxu0 0
        %672 = vmatprep.subr.bf16.mxu0 0
        %673 = vmatpush2.bf16.msra.mxu0 0
        %674 = vmatprep.subr.bf16.mxu0 0
        %675 = vmatpush2.bf16.msra.mxu0 0
        %676 = vmatprep.subr.bf16.mxu0 0
        %677 = vmatpush2.bf16.msra.mxu0 0
        %678 = vmatprep.mubr.bf16.mxu0 0
        %679 = vmatmul.mubr.bf16.gmra.mxu0 %v641
        %v680 = vpop.f32.mrf.mxu0
        %v681 = vadd.f32 0.0, %v680
        %v682 = vpop.f32.mrf.mxu0
        %v683 = vpop.f32.mrf.mxu0
        %v684 = vpop.f32.mrf.mxu0
        %685 = vdwg.mxu0
        %v686 = vadd.f32 %v626, %v681
        %v687 = vld [vmem:[%s276 + $0x2] sm:$0x3]
        %s688 = scalar_lea.vmem %s1, 28
        %v689 = vld [vmem:[%s688] sm:$0xf]
        %v692 = vunpack.c.l.s4 1983009808
        %v693 = vunpack.c.0.s8 %v692
        %v694 = vlaneseq
        %v695 = vshrl.u32 %v694, 7
        %v696 = vsub.s32 %v693, %v695
        %v697 = vrot.slane %v687, %v696
        %698 = vrot.lane.b32.xlu0 %v697, 116
        %v699 = vpop.permute.xlu0 %698
        %v701 = vsel %vm293, %v689, 0
        %v704 = vsel %vm297, %v699, 0
        %706 = vmatprep.subr.bf16.mxu0 0
        %707 = vmatpush1.bf16.msra.mxu0 0
        %708 = vmatprep.subr.bf16.mxu0 0
        %709 = vmatpush1.bf16.msra.mxu0 0
        %710 = vmatprep.subr.bf16.mxu0 0
        %711 = vmatpush1.bf16.msra.mxu0 0
        %712 = vmatprep.subr.bf16.mxu0 0
        %713 = vmatpush1.bf16.msra.mxu0 0
        %714 = vmatprep.subr.bf16.mxu0 0
        %715 = vmatpush1.bf16.msra.mxu0 0
        %716 = vmatprep.subr.bf16.mxu0 0
        %717 = vmatpush1.bf16.msra.mxu0 0
        %718 = vmatprep.subr.bf16.mxu0 0
        %719 = vmatpush1.bf16.msra.mxu0 0
        %720 = vmatprep.subr.bf16.mxu0 0
        %721 = vmatpush1.bf16.msra.mxu0 %v704
        %722 = vmatprep.subr.bf16.mxu0 0
        %723 = vmatpush2.bf16.msra.mxu0 0
        %724 = vmatprep.subr.bf16.mxu0 0
        %725 = vmatpush2.bf16.msra.mxu0 0
        %726 = vmatprep.subr.bf16.mxu0 0
        %727 = vmatpush2.bf16.msra.mxu0 0
        %728 = vmatprep.subr.bf16.mxu0 0
        %729 = vmatpush2.bf16.msra.mxu0 0
        %730 = vmatprep.subr.bf16.mxu0 0
        %731 = vmatpush2.bf16.msra.mxu0 0
        %732 = vmatprep.subr.bf16.mxu0 0
        %733 = vmatpush2.bf16.msra.mxu0 0
        %734 = vmatprep.subr.bf16.mxu0 0
        %735 = vmatpush2.bf16.msra.mxu0 0
        %736 = vmatprep.subr.bf16.mxu0 0
        %737 = vmatpush2.bf16.msra.mxu0 0
        %738 = vmatprep.mubr.bf16.mxu0 0
        %739 = vmatmul.mubr.bf16.gmra.mxu0 %v701
        %v740 = vpop.f32.mrf.mxu0
        %v741 = vadd.f32 0.0, %v740
        %v742 = vpop.f32.mrf.mxu0
        %v743 = vpop.f32.mrf.mxu0
        %v744 = vpop.f32.mrf.mxu0
        %745 = vdwg.mxu0
        %v746 = vadd.f32 %v686, %v741
        %v747 = vld [vmem:[%s276] sm:$0x3]
        %s748 = scalar_lea.vmem %s1, 32
        %v749 = vld [vmem:[%s748] sm:$0xf]
        %v752 = vunpack.c.l.s4 1983009808
        %v753 = vunpack.c.0.s8 %v752
        %v754 = vlaneseq
        %v755 = vshrl.u32 %v754, 7
        %v756 = vsub.s32 %v753, %v755
        %v757 = vrot.slane %v747, %v756
        %758 = vrot.lane.b32.xlu0 %v757, 117
        %v759 = vpop.permute.xlu0 %758
        %v761 = vsel %vm293, %v749, 0
        %v764 = vsel %vm297, %v759, 0
        %766 = vmatprep.subr.bf16.mxu0 0
        %767 = vmatpush1.bf16.msra.mxu0 0
        %768 = vmatprep.subr.bf16.mxu0 0
        %769 = vmatpush1.bf16.msra.mxu0 0
        %770 = vmatprep.subr.bf16.mxu0 0
        %771 = vmatpush1.bf16.msra.mxu0 0
        %772 = vmatprep.subr.bf16.mxu0 0
        %773 = vmatpush1.bf16.msra.mxu0 0
        %774 = vmatprep.subr.bf16.mxu0 0
        %775 = vmatpush1.bf16.msra.mxu0 0
        %776 = vmatprep.subr.bf16.mxu0 0
        %777 = vmatpush1.bf16.msra.mxu0 0
        %778 = vmatprep.subr.bf16.mxu0 0
        %779 = vmatpush1.bf16.msra.mxu0 0
        %780 = vmatprep.subr.bf16.mxu0 0
        %781 = vmatpush1.bf16.msra.mxu0 %v764
        %782 = vmatprep.subr.bf16.mxu0 0
        %783 = vmatpush2.bf16.msra.mxu0 0
        %784 = vmatprep.subr.bf16.mxu0 0
        %785 = vmatpush2.bf16.msra.mxu0 0
        %786 = vmatprep.subr.bf16.mxu0 0
        %787 = vmatpush2.bf16.msra.mxu0 0
        %788 = vmatprep.subr.bf16.mxu0 0
        %789 = vmatpush2.bf16.msra.mxu0 0
        %790 = vmatprep.subr.bf16.mxu0 0
        %791 = vmatpush2.bf16.msra.mxu0 0
        %792 = vmatprep.subr.bf16.mxu0 0
        %793 = vmatpush2.bf16.msra.mxu0 0
        %794 = vmatprep.subr.bf16.mxu0 0
        %795 = vmatpush2.bf16.msra.mxu0 0
        %796 = vmatprep.subr.bf16.mxu0 0
        %797 = vmatpush2.bf16.msra.mxu0 0
        %798 = vmatprep.mubr.bf16.mxu0 0
        %799 = vmatmul.mubr.bf16.gmra.mxu0 %v761
        %v800 = vpop.f32.mrf.mxu0
        %v801 = vadd.f32 0.0, %v800
        %v802 = vpop.f32.mrf.mxu0
        %v803 = vpop.f32.mrf.mxu0
        %v804 = vpop.f32.mrf.mxu0
        %805 = vdwg.mxu0
        %v806 = vadd.f32 %v746, %v801
        %v807 = vld [vmem:[%s2] sm:$0xff]
        %809 = vset.pattern.permute.xlu0 0
        %810 = vperm.xlu0 %809, %v807
        %v811 = vpop.permute.xlu0 %810
        %v813 = vadd.f32 %v806, %v811
        %v814 = vmax.f32 %v813, 0.0
        %v815 = vld [vmem:[%s3] sm:$0x1]
        %v817 = vlaneseq
        %v818 = vshrl.u32 %v817, 7
        %v819 = vsub.s32 0, %v818
        %v820 = vrot.slane %v815, %v819
        %v822 = vmul.f32 %v814, %v820
        %v823 = vpack.c.bf16 %v822, %v822
        %vm824 = vcmask 896000
        %825 = vst.msk [vmem:[#allocation2] sm:$0xf] %vm824, %v823
        %v826 = vld [vmem:[#allocation2] sm:$0xf]
        %v827 = vld [vmem:[%s4] sm:$0xf]
        %s828 = scalar_lea.vmem %s4, 4
        %v829 = vld [vmem:[%s828] sm:$0xf]
        %v831 = vunpack.c.l.b16 %v826
        %v832 = vpack.c.b16 %v831, %v831
        %833 = vrot.lane.b32.xlu0 %v832, 127
        %v834 = vpop.permute.xlu0 %833
        %vm835 = vcmask 64512
        %v837 = vsel %vm835, %v829, 0
        %vm839 = vcmask 1043456
        %v841 = vsel %vm839, %v834, 0
        %843 = vmatprep.subr.bf16.mxu0 0
        %844 = vmatpush1.bf16.msra.mxu0 0
        %845 = vmatprep.subr.bf16.mxu0 0
        %846 = vmatpush1.bf16.msra.mxu0 0
        %847 = vmatprep.subr.bf16.mxu0 0
        %848 = vmatpush1.bf16.msra.mxu0 0
        %849 = vmatprep.subr.bf16.mxu0 0
        %850 = vmatpush1.bf16.msra.mxu0 0
        %851 = vmatprep.subr.bf16.mxu0 0
        %852 = vmatpush1.bf16.msra.mxu0 0
        %853 = vmatprep.subr.bf16.mxu0 0
        %854 = vmatpush1.bf16.msra.mxu0 0
        %855 = vmatprep.subr.bf16.mxu0 0
        %856 = vmatpush1.bf16.msra.mxu0 0
        %857 = vmatprep.subr.bf16.mxu0 0
        %858 = vmatpush1.bf16.msra.mxu0 %v841
        %859 = vmatprep.subr.bf16.mxu0 0
        %860 = vmatpush2.bf16.msra.mxu0 0
        %861 = vmatprep.subr.bf16.mxu0 0
        %862 = vmatpush2.bf16.msra.mxu0 0
        %863 = vmatprep.subr.bf16.mxu0 0
        %864 = vmatpush2.bf16.msra.mxu0 0
        %865 = vmatprep.subr.bf16.mxu0 0
        %866 = vmatpush2.bf16.msra.mxu0 0
        %867 = vmatprep.subr.bf16.mxu0 0
        %868 = vmatpush2.bf16.msra.mxu0 0
        %869 = vmatprep.subr.bf16.mxu0 0
        %870 = vmatpush2.bf16.msra.mxu0 0
        %871 = vmatprep.subr.bf16.mxu0 0
        %872 = vmatpush2.bf16.msra.mxu0 0
        %873 = vmatprep.subr.bf16.mxu0 0
        %874 = vmatpush2.bf16.msra.mxu0 0
        %875 = vmatprep.mubr.bf16.mxu0 0
        %876 = vmatmul.mubr.bf16.gmra.mxu0 %v837
        %v877 = vpop.f32.mrf.mxu0
        %v878 = vadd.f32 0.0, %v877
        %v879 = vpop.f32.mrf.mxu0
        %v880 = vpop.f32.mrf.mxu0
        %v881 = vpop.f32.mrf.mxu0
        %882 = vdwg.mxu0
        %v884 = vsel %vm835, %v827, 0
        %v887 = vsel %vm839, %v826, 0
        %889 = vmatprep.subr.bf16.mxu0 0
        %890 = vmatpush1.bf16.msra.mxu0 0
        %891 = vmatprep.subr.bf16.mxu0 0
        %892 = vmatpush1.bf16.msra.mxu0 0
        %893 = vmatprep.subr.bf16.mxu0 0
        %894 = vmatpush1.bf16.msra.mxu0 0
        %895 = vmatprep.subr.bf16.mxu0 0
        %896 = vmatpush1.bf16.msra.mxu0 0
        %897 = vmatprep.subr.bf16.mxu0 0
        %898 = vmatpush1.bf16.msra.mxu0 0
        %899 = vmatprep.subr.bf16.mxu0 0
        %900 = vmatpush1.bf16.msra.mxu0 0
        %901 = vmatprep.subr.bf16.mxu0 0
        %902 = vmatpush1.bf16.msra.mxu0 0
        %903 = vmatprep.subr.bf16.mxu0 0
        %904 = vmatpush1.bf16.msra.mxu0 %v887
        %905 = vmatprep.subr.bf16.mxu0 0
        %906 = vmatpush2.bf16.msra.mxu0 0
        %907 = vmatprep.subr.bf16.mxu0 0
        %908 = vmatpush2.bf16.msra.mxu0 0
        %909 = vmatprep.subr.bf16.mxu0 0
        %910 = vmatpush2.bf16.msra.mxu0 0
        %911 = vmatprep.subr.bf16.mxu0 0
        %912 = vmatpush2.bf16.msra.mxu0 0
        %913 = vmatprep.subr.bf16.mxu0 0
        %914 = vmatpush2.bf16.msra.mxu0 0
        %915 = vmatprep.subr.bf16.mxu0 0
        %916 = vmatpush2.bf16.msra.mxu0 0
        %917 = vmatprep.subr.bf16.mxu0 0
        %918 = vmatpush2.bf16.msra.mxu0 0
        %919 = vmatprep.subr.bf16.mxu0 0
        %920 = vmatpush2.bf16.msra.mxu0 0
        %921 = vmatprep.mubr.bf16.mxu0 0
        %922 = vmatmul.mubr.bf16.gmra.mxu0 %v884
        %v923 = vpop.f32.mrf.mxu0
        %v924 = vadd.f32 %v878, %v923
        %v925 = vpop.f32.mrf.mxu0
        %v926 = vpop.f32.mrf.mxu0
        %v927 = vpop.f32.mrf.mxu0
        %928 = vdwg.mxu0
        %s929 = scalar_lea.vmem %s4, 8
        %v930 = vld [vmem:[%s929] sm:$0xf]
        %931 = vrot.lane.b32.xlu0 %v832, 126
        %v932 = vpop.permute.xlu0 %931
        %v934 = vsel %vm835, %v930, 0
        %v937 = vsel %vm839, %v932, 0
        %939 = vmatprep.subr.bf16.mxu0 0
        %940 = vmatpush1.bf16.msra.mxu0 0
        %941 = vmatprep.subr.bf16.mxu0 0
        %942 = vmatpush1.bf16.msra.mxu0 0
        %943 = vmatprep.subr.bf16.mxu0 0
        %944 = vmatpush1.bf16.msra.mxu0 0
        %945 = vmatprep.subr.bf16.mxu0 0
        %946 = vmatpush1.bf16.msra.mxu0 0
        %947 = vmatprep.subr.bf16.mxu0 0
        %948 = vmatpush1.bf16.msra.mxu0 0
        %949 = vmatprep.subr.bf16.mxu0 0
        %950 = vmatpush1.bf16.msra.mxu0 0
        %951 = vmatprep.subr.bf16.mxu0 0
        %952 = vmatpush1.bf16.msra.mxu0 0
        %953 = vmatprep.subr.bf16.mxu0 0
        %954 = vmatpush1.bf16.msra.mxu0 %v937
        %955 = vmatprep.subr.bf16.mxu0 0
        %956 = vmatpush2.bf16.msra.mxu0 0
        %957 = vmatprep.subr.bf16.mxu0 0
        %958 = vmatpush2.bf16.msra.mxu0 0
        %959 = vmatprep.subr.bf16.mxu0 0
        %960 = vmatpush2.bf16.msra.mxu0 0
        %961 = vmatprep.subr.bf16.mxu0 0
        %962 = vmatpush2.bf16.msra.mxu0 0
        %963 = vmatprep.subr.bf16.mxu0 0
        %964 = vmatpush2.bf16.msra.mxu0 0
        %965 = vmatprep.subr.bf16.mxu0 0
        %966 = vmatpush2.bf16.msra.mxu0 0
        %967 = vmatprep.subr.bf16.mxu0 0
        %968 = vmatpush2.bf16.msra.mxu0 0
        %969 = vmatprep.subr.bf16.mxu0 0
        %970 = vmatpush2.bf16.msra.mxu0 0
        %971 = vmatprep.mubr.bf16.mxu0 0
        %972 = vmatmul.mubr.bf16.gmra.mxu0 %v934
        %v973 = vpop.f32.mrf.mxu0
        %v974 = vadd.f32 0.0, %v973
        %v975 = vpop.f32.mrf.mxu0
        %v976 = vpop.f32.mrf.mxu0
        %v977 = vpop.f32.mrf.mxu0
        %978 = vdwg.mxu0
        %v979 = vadd.f32 %v924, %v974
        %s980 = scalar_lea.vmem %s4, 12
        %v981 = vld [vmem:[%s980] sm:$0xf]
        %982 = vrot.lane.b32.xlu0 %v832, 118
        %v983 = vpop.permute.xlu0 %982
        %v985 = vsel %vm835, %v981, 0
        %v988 = vsel %vm839, %v983, 0
        %990 = vmatprep.subr.bf16.mxu0 0
        %991 = vmatpush1.bf16.msra.mxu0 0
        %992 = vmatprep.subr.bf16.mxu0 0
        %993 = vmatpush1.bf16.msra.mxu0 0
        %994 = vmatprep.subr.bf16.mxu0 0
        %995 = vmatpush1.bf16.msra.mxu0 0
        %996 = vmatprep.subr.bf16.mxu0 0
        %997 = vmatpush1.bf16.msra.mxu0 0
        %998 = vmatprep.subr.bf16.mxu0 0
        %999 = vmatpush1.bf16.msra.mxu0 0
        %1000 = vmatprep.subr.bf16.mxu0 0
        %1001 = vmatpush1.bf16.msra.mxu0 0
        %1002 = vmatprep.subr.bf16.mxu0 0
        %1003 = vmatpush1.bf16.msra.mxu0 0
        %1004 = vmatprep.subr.bf16.mxu0 0
        %1005 = vmatpush1.bf16.msra.mxu0 %v988
        %1006 = vmatprep.subr.bf16.mxu0 0
        %1007 = vmatpush2.bf16.msra.mxu0 0
        %1008 = vmatprep.subr.bf16.mxu0 0
        %1009 = vmatpush2.bf16.msra.mxu0 0
        %1010 = vmatprep.subr.bf16.mxu0 0
        %1011 = vmatpush2.bf16.msra.mxu0 0
        %1012 = vmatprep.subr.bf16.mxu0 0
        %1013 = vmatpush2.bf16.msra.mxu0 0
        %1014 = vmatprep.subr.bf16.mxu0 0
        %1015 = vmatpush2.bf16.msra.mxu0 0
        %1016 = vmatprep.subr.bf16.mxu0 0
        %1017 = vmatpush2.bf16.msra.mxu0 0
        %1018 = vmatprep.subr.bf16.mxu0 0
        %1019 = vmatpush2.bf16.msra.mxu0 0
        %1020 = vmatprep.subr.bf16.mxu0 0
        %1021 = vmatpush2.bf16.msra.mxu0 0
        %1022 = vmatprep.mubr.bf16.mxu0 0
        %1023 = vmatmul.mubr.bf16.gmra.mxu0 %v985
        %v1024 = vpop.f32.mrf.mxu0
        %v1025 = vadd.f32 0.0, %v1024
        %v1026 = vpop.f32.mrf.mxu0
        %v1027 = vpop.f32.mrf.mxu0
        %v1028 = vpop.f32.mrf.mxu0
        %1029 = vdwg.mxu0
        %v1030 = vadd.f32 %v979, %v1025
        %s1031 = scalar_lea.vmem %s4, 16
        %v1032 = vld [vmem:[%s1031] sm:$0xf]
        %1033 = vrot.lane.b32.xlu0 %v832, 117
        %v1034 = vpop.permute.xlu0 %1033
        %v1036 = vsel %vm835, %v1032, 0
        %v1039 = vsel %vm839, %v1034, 0
        %1041 = vmatprep.subr.bf16.mxu0 0
        %1042 = vmatpush1.bf16.msra.mxu0 0
        %1043 = vmatprep.subr.bf16.mxu0 0
        %1044 = vmatpush1.bf16.msra.mxu0 0
        %1045 = vmatprep.subr.bf16.mxu0 0
        %1046 = vmatpush1.bf16.msra.mxu0 0
        %1047 = vmatprep.subr.bf16.mxu0 0
        %1048 = vmatpush1.bf16.msra.mxu0 0
        %1049 = vmatprep.subr.bf16.mxu0 0
        %1050 = vmatpush1.bf16.msra.mxu0 0
        %1051 = vmatprep.subr.bf16.mxu0 0
        %1052 = vmatpush1.bf16.msra.mxu0 0
        %1053 = vmatprep.subr.bf16.mxu0 0
        %1054 = vmatpush1.bf16.msra.mxu0 0
        %1055 = vmatprep.subr.bf16.mxu0 0
        %1056 = vmatpush1.bf16.msra.mxu0 %v1039
        %1057 = vmatprep.subr.bf16.mxu0 0
        %1058 = vmatpush2.bf16.msra.mxu0 0
        %1059 = vmatprep.subr.bf16.mxu0 0
        %1060 = vmatpush2.bf16.msra.mxu0 0
        %1061 = vmatprep.subr.bf16.mxu0 0
        %1062 = vmatpush2.bf16.msra.mxu0 0
        %1063 = vmatprep.subr.bf16.mxu0 0
        %1064 = vmatpush2.bf16.msra.mxu0 0
        %1065 = vmatprep.subr.bf16.mxu0 0
        %1066 = vmatpush2.bf16.msra.mxu0 0
        %1067 = vmatprep.subr.bf16.mxu0 0
        %1068 = vmatpush2.bf16.msra.mxu0 0
        %1069 = vmatprep.subr.bf16.mxu0 0
        %1070 = vmatpush2.bf16.msra.mxu0 0
        %1071 = vmatprep.subr.bf16.mxu0 0
        %1072 = vmatpush2.bf16.msra.mxu0 0
        %1073 = vmatprep.mubr.bf16.mxu0 0
        %1074 = vmatmul.mubr.bf16.gmra.mxu0 %v1036
        %v1075 = vpop.f32.mrf.mxu0
        %v1076 = vadd.f32 0.0, %v1075
        %v1077 = vpop.f32.mrf.mxu0
        %v1078 = vpop.f32.mrf.mxu0
        %v1079 = vpop.f32.mrf.mxu0
        %1080 = vdwg.mxu0
        %v1081 = vadd.f32 %v1030, %v1076
        %s1082 = scalar_lea.vmem %s4, 20
        %v1083 = vld [vmem:[%s1082] sm:$0xf]
        %1084 = vrot.lane.b32.xlu0 %v832, 116
        %v1085 = vpop.permute.xlu0 %1084
        %v1087 = vsel %vm835, %v1083, 0
        %v1090 = vsel %vm839, %v1085, 0
        %1092 = vmatprep.subr.bf16.mxu0 0
        %1093 = vmatpush1.bf16.msra.mxu0 0
        %1094 = vmatprep.subr.bf16.mxu0 0
        %1095 = vmatpush1.bf16.msra.mxu0 0
        %1096 = vmatprep.subr.bf16.mxu0 0
        %1097 = vmatpush1.bf16.msra.mxu0 0
        %1098 = vmatprep.subr.bf16.mxu0 0
        %1099 = vmatpush1.bf16.msra.mxu0 0
        %1100 = vmatprep.subr.bf16.mxu0 0
        %1101 = vmatpush1.bf16.msra.mxu0 0
        %1102 = vmatprep.subr.bf16.mxu0 0
        %1103 = vmatpush1.bf16.msra.mxu0 0
        %1104 = vmatprep.subr.bf16.mxu0 0
        %1105 = vmatpush1.bf16.msra.mxu0 0
        %1106 = vmatprep.subr.bf16.mxu0 0
        %1107 = vmatpush1.bf16.msra.mxu0 %v1090
        %1108 = vmatprep.subr.bf16.mxu0 0
        %1109 = vmatpush2.bf16.msra.mxu0 0
        %1110 = vmatprep.subr.bf16.mxu0 0
        %1111 = vmatpush2.bf16.msra.mxu0 0
        %1112 = vmatprep.subr.bf16.mxu0 0
        %1113 = vmatpush2.bf16.msra.mxu0 0
        %1114 = vmatprep.subr.bf16.mxu0 0
        %1115 = vmatpush2.bf16.msra.mxu0 0
        %1116 = vmatprep.subr.bf16.mxu0 0
        %1117 = vmatpush2.bf16.msra.mxu0 0
        %1118 = vmatprep.subr.bf16.mxu0 0
        %1119 = vmatpush2.bf16.msra.mxu0 0
        %1120 = vmatprep.subr.bf16.mxu0 0
        %1121 = vmatpush2.bf16.msra.mxu0 0
        %1122 = vmatprep.subr.bf16.mxu0 0
        %1123 = vmatpush2.bf16.msra.mxu0 0
        %1124 = vmatprep.mubr.bf16.mxu0 0
        %1125 = vmatmul.mubr.bf16.gmra.mxu0 %v1087
        %v1126 = vpop.f32.mrf.mxu0
        %v1127 = vadd.f32 0.0, %v1126
        %v1128 = vpop.f32.mrf.mxu0
        %v1129 = vpop.f32.mrf.mxu0
        %v1130 = vpop.f32.mrf.mxu0
        %1131 = vdwg.mxu0
        %v1132 = vadd.f32 %v1081, %v1127
        %s1133 = scalar_lea.vmem %s4, 24
        %v1134 = vld [vmem:[%s1133] sm:$0xf]
        %1135 = vrot.lane.b32.xlu0 %v832, 108
        %v1136 = vpop.permute.xlu0 %1135
        %v1138 = vsel %vm835, %v1134, 0
        %v1141 = vsel %vm839, %v1136, 0
        %1143 = vmatprep.subr.bf16.mxu0 0
        %1144 = vmatpush1.bf16.msra.mxu0 0
        %1145 = vmatprep.subr.bf16.mxu0 0
        %1146 = vmatpush1.bf16.msra.mxu0 0
        %1147 = vmatprep.subr.bf16.mxu0 0
        %1148 = vmatpush1.bf16.msra.mxu0 0
        %1149 = vmatprep.subr.bf16.mxu0 0
        %1150 = vmatpush1.bf16.msra.mxu0 0
        %1151 = vmatprep.subr.bf16.mxu0 0
        %1152 = vmatpush1.bf16.msra.mxu0 0
        %1153 = vmatprep.subr.bf16.mxu0 0
        %1154 = vmatpush1.bf16.msra.mxu0 0
        %1155 = vmatprep.subr.bf16.mxu0 0
        %1156 = vmatpush1.bf16.msra.mxu0 0
        %1157 = vmatprep.subr.bf16.mxu0 0
        %1158 = vmatpush1.bf16.msra.mxu0 %v1141
        %1159 = vmatprep.subr.bf16.mxu0 0
        %1160 = vmatpush2.bf16.msra.mxu0 0
        %1161 = vmatprep.subr.bf16.mxu0 0
        %1162 = vmatpush2.bf16.msra.mxu0 0
        %1163 = vmatprep.subr.bf16.mxu0 0
        %1164 = vmatpush2.bf16.msra.mxu0 0
        %1165 = vmatprep.subr.bf16.mxu0 0
        %1166 = vmatpush2.bf16.msra.mxu0 0
        %1167 = vmatprep.subr.bf16.mxu0 0
        %1168 = vmatpush2.bf16.msra.mxu0 0
        %1169 = vmatprep.subr.bf16.mxu0 0
        %1170 = vmatpush2.bf16.msra.mxu0 0
        %1171 = vmatprep.subr.bf16.mxu0 0
        %1172 = vmatpush2.bf16.msra.mxu0 0
        %1173 = vmatprep.subr.bf16.mxu0 0
        %1174 = vmatpush2.bf16.msra.mxu0 0
        %1175 = vmatprep.mubr.bf16.mxu0 0
        %1176 = vmatmul.mubr.bf16.gmra.mxu0 %v1138
        %v1177 = vpop.f32.mrf.mxu0
        %v1178 = vadd.f32 0.0, %v1177
        %v1179 = vpop.f32.mrf.mxu0
        %v1180 = vpop.f32.mrf.mxu0
        %v1181 = vpop.f32.mrf.mxu0
        %1182 = vdwg.mxu0
        %v1183 = vadd.f32 %v1132, %v1178
        %s1184 = scalar_lea.vmem %s4, 28
        %v1185 = vld [vmem:[%s1184] sm:$0xf]
        %1186 = vrot.lane.b32.xlu0 %v832, 107
        %v1187 = vpop.permute.xlu0 %1186
        %v1189 = vsel %vm835, %v1185, 0
        %v1192 = vsel %vm839, %v1187, 0
        %1194 = vmatprep.subr.bf16.mxu0 0
        %1195 = vmatpush1.bf16.msra.mxu0 0
        %1196 = vmatprep.subr.bf16.mxu0 0
        %1197 = vmatpush1.bf16.msra.mxu0 0
        %1198 = vmatprep.subr.bf16.mxu0 0
        %1199 = vmatpush1.bf16.msra.mxu0 0
        %1200 = vmatprep.subr.bf16.mxu0 0
        %1201 = vmatpush1.bf16.msra.mxu0 0
        %1202 = vmatprep.subr.bf16.mxu0 0
        %1203 = vmatpush1.bf16.msra.mxu0 0
        %1204 = vmatprep.subr.bf16.mxu0 0
        %1205 = vmatpush1.bf16.msra.mxu0 0
        %1206 = vmatprep.subr.bf16.mxu0 0
        %1207 = vmatpush1.bf16.msra.mxu0 0
        %1208 = vmatprep.subr.bf16.mxu0 0
        %1209 = vmatpush1.bf16.msra.mxu0 %v1192
        %1210 = vmatprep.subr.bf16.mxu0 0
        %1211 = vmatpush2.bf16.msra.mxu0 0
        %1212 = vmatprep.subr.bf16.mxu0 0
        %1213 = vmatpush2.bf16.msra.mxu0 0
        %1214 = vmatprep.subr.bf16.mxu0 0
        %1215 = vmatpush2.bf16.msra.mxu0 0
        %1216 = vmatprep.subr.bf16.mxu0 0
        %1217 = vmatpush2.bf16.msra.mxu0 0
        %1218 = vmatprep.subr.bf16.mxu0 0
        %1219 = vmatpush2.bf16.msra.mxu0 0
        %1220 = vmatprep.subr.bf16.mxu0 0
        %1221 = vmatpush2.bf16.msra.mxu0 0
        %1222 = vmatprep.subr.bf16.mxu0 0
        %1223 = vmatpush2.bf16.msra.mxu0 0
        %1224 = vmatprep.subr.bf16.mxu0 0
        %1225 = vmatpush2.bf16.msra.mxu0 0
        %1226 = vmatprep.mubr.bf16.mxu0 0
        %1227 = vmatmul.mubr.bf16.gmra.mxu0 %v1189
        %v1228 = vpop.f32.mrf.mxu0
        %v1229 = vadd.f32 0.0, %v1228
        %v1230 = vpop.f32.mrf.mxu0
        %v1231 = vpop.f32.mrf.mxu0
        %v1232 = vpop.f32.mrf.mxu0
        %1233 = vdwg.mxu0
        %v1234 = vadd.f32 %v1183, %v1229
        %s1235 = scalar_lea.vmem %s4, 32
        %v1236 = vld [vmem:[%s1235] sm:$0xf]
        %1237 = vrot.lane.b32.xlu0 %v832, 106
        %v1238 = vpop.permute.xlu0 %1237
        %v1240 = vsel %vm835, %v1236, 0
        %v1243 = vsel %vm839, %v1238, 0
        %1245 = vmatprep.subr.bf16.mxu0 0
        %1246 = vmatpush1.bf16.msra.mxu0 0
        %1247 = vmatprep.subr.bf16.mxu0 0
        %1248 = vmatpush1.bf16.msra.mxu0 0
        %1249 = vmatprep.subr.bf16.mxu0 0
        %1250 = vmatpush1.bf16.msra.mxu0 0
        %1251 = vmatprep.subr.bf16.mxu0 0
        %1252 = vmatpush1.bf16.msra.mxu0 0
        %1253 = vmatprep.subr.bf16.mxu0 0
        %1254 = vmatpush1.bf16.msra.mxu0 0
        %1255 = vmatprep.subr.bf16.mxu0 0
        %1256 = vmatpush1.bf16.msra.mxu0 0
        %1257 = vmatprep.subr.bf16.mxu0 0
        %1258 = vmatpush1.bf16.msra.mxu0 0
        %1259 = vmatprep.subr.bf16.mxu0 0
        %1260 = vmatpush1.bf16.msra.mxu0 %v1243
        %1261 = vmatprep.subr.bf16.mxu0 0
        %1262 = vmatpush2.bf16.msra.mxu0 0
        %1263 = vmatprep.subr.bf16.mxu0 0
        %1264 = vmatpush2.bf16.msra.mxu0 0
        %1265 = vmatprep.subr.bf16.mxu0 0
        %1266 = vmatpush2.bf16.msra.mxu0 0
        %1267 = vmatprep.subr.bf16.mxu0 0
        %1268 = vmatpush2.bf16.msra.mxu0 0
        %1269 = vmatprep.subr.bf16.mxu0 0
        %1270 = vmatpush2.bf16.msra.mxu0 0
        %1271 = vmatprep.subr.bf16.mxu0 0
        %1272 = vmatpush2.bf16.msra.mxu0 0
        %1273 = vmatprep.subr.bf16.mxu0 0
        %1274 = vmatpush2.bf16.msra.mxu0 0
        %1275 = vmatprep.subr.bf16.mxu0 0
        %1276 = vmatpush2.bf16.msra.mxu0 0
        %1277 = vmatprep.mubr.bf16.mxu0 0
        %1278 = vmatmul.mubr.bf16.gmra.mxu0 %v1240
        %v1279 = vpop.f32.mrf.mxu0
        %v1280 = vadd.f32 0.0, %v1279
        %v1281 = vpop.f32.mrf.mxu0
        %v1282 = vpop.f32.mrf.mxu0
        %v1283 = vpop.f32.mrf.mxu0
        %1284 = vdwg.mxu0
        %v1285 = vadd.f32 %v1234, %v1280
        %v1286 = vld [vmem:[%s5] sm:$0xff]
        %1288 = vset.pattern.permute.xlu0 0
        %1289 = vperm.xlu0 %1288, %v1286
        %v1290 = vpop.permute.xlu0 %1289
        %v1292 = vadd.f32 %v1285, %v1290
        %v1293 = vld [vmem:[%s276 + $0x6] sm:$0x3]
        %v1294 = vld [vmem:[%s6] sm:$0xf]
        %v1297 = vunpack.c.l.s4 1983009808
        %v1298 = vunpack.c.0.s8 %v1297
        %v1299 = vlaneseq
        %v1300 = vshrl.u32 %v1299, 7
        %v1301 = vsub.s32 %v1298, %v1300
        %v1302 = vrot.slane %v1293, %v1301
        %1303 = vrot.lane.b32.xlu0 %v1302, 111
        %v1304 = vpop.permute.xlu0 %1303
        %v1306 = vsel %vm293, %v1294, 0
        %v1309 = vsel %vm297, %v1304, 0
        %1311 = vmatprep.subr.bf16.mxu0 0
        %1312 = vmatpush1.bf16.msra.mxu0 0
        %1313 = vmatprep.subr.bf16.mxu0 0
        %1314 = vmatpush1.bf16.msra.mxu0 0
        %1315 = vmatprep.subr.bf16.mxu0 0
        %1316 = vmatpush1.bf16.msra.mxu0 0
        %1317 = vmatprep.subr.bf16.mxu0 0
        %1318 = vmatpush1.bf16.msra.mxu0 0
        %1319 = vmatprep.subr.bf16.mxu0 0
        %1320 = vmatpush1.bf16.msra.mxu0 0
        %1321 = vmatprep.subr.bf16.mxu0 0
        %1322 = vmatpush1.bf16.msra.mxu0 0
        %1323 = vmatprep.subr.bf16.mxu0 0
        %1324 = vmatpush1.bf16.msra.mxu0 0
        %1325 = vmatprep.subr.bf16.mxu0 0
        %1326 = vmatpush1.bf16.msra.mxu0 %v1309
        %1327 = vmatprep.subr.bf16.mxu0 0
        %1328 = vmatpush2.bf16.msra.mxu0 0
        %1329 = vmatprep.subr.bf16.mxu0 0
        %1330 = vmatpush2.bf16.msra.mxu0 0
        %1331 = vmatprep.subr.bf16.mxu0 0
        %1332 = vmatpush2.bf16.msra.mxu0 0
        %1333 = vmatprep.subr.bf16.mxu0 0
        %1334 = vmatpush2.bf16.msra.mxu0 0
        %1335 = vmatprep.subr.bf16.mxu0 0
        %1336 = vmatpush2.bf16.msra.mxu0 0
        %1337 = vmatprep.subr.bf16.mxu0 0
        %1338 = vmatpush2.bf16.msra.mxu0 0
        %1339 = vmatprep.subr.bf16.mxu0 0
        %1340 = vmatpush2.bf16.msra.mxu0 0
        %1341 = vmatprep.subr.bf16.mxu0 0
        %1342 = vmatpush2.bf16.msra.mxu0 0
        %1343 = vmatprep.mubr.bf16.mxu0 0
        %1344 = vmatmul.mubr.bf16.gmra.mxu0 %v1306
        %v1345 = vpop.f32.mrf.mxu0
        %v1346 = vadd.f32 0.0, %v1345
        %v1347 = vpop.f32.mrf.mxu0
        %v1348 = vpop.f32.mrf.mxu0
        %v1349 = vpop.f32.mrf.mxu0
        %1350 = vdwg.mxu0
        %v1351 = vadd.f32 %v1292, %v1346
        %v1352 = vmax.f32 %v1351, 0.0
        %vm1353 = vcmask 654336
        %1354 = vst.msk [vmem:[%s271] sm:$0xff] %vm1353, %v1352
        %s1355 = sand.u32 %s181, 1
        %s1356 = scalar_lea.sflag [#allocation4], %s1355
        %s1357 = sand.u32 %s181, 1
        %s1358 = smul.addr %s1357, 8
        %s1359 = scalar_lea.vmem [#allocation3], %s1358
        // Predicated region
        $region49: #{tpu_custom_call.1} parent=47 // pred_check
          %p1360 = pneg %p191
        $region50: #{tpu_custom_call.1} parent=47 // pred_check_branch
          %1362 = sbr.rel (%p1360) target = $region52
        $region51: #{tpu_custom_call.1} parent=47 // pred_region
          %s1364 = ssub.s32 128, 128
          %1365 = vsyncadd %s1356, %s1364
          %s1366 = smul.addr %s21, 128
          %s1367 = scalar_lea.hbm %s7, %s1366
          %s1369 = sshll.u32 %s1359, 4
          %s1370 = int_to_ptr.vmem [resolvable:$true] %s1369
          %1372 = dma.vmem_to_hbm [thread:$0]  %s1370, 128, %s1367, %s1356
        $region52: #{tpu_custom_call.1} parent=47 // pred_fallthru
          _
      $region48: #{tpu_custom_call.1} parent=5 // pred_fallthru
        _
      %p1373 = scmp.le.s32.totalorder 2, %s16
      // Predicated region
      $region53: #{tpu_custom_call.1} parent=5 // pred_check
        %p1374 = pneg %p1373
      $region54: #{tpu_custom_call.1} parent=5 // pred_check_branch
        %1376 = sbr.rel (%p1374) target = $region56
      $region55: #{tpu_custom_call.1} parent=5 // pred_region
        %s1377 = ssub.s32 %s16, 2
        // Predicated region
        $region57: #{tpu_custom_call.1} parent=55 // pred_check
          %p1378 = pneg %p197
        $region58: #{tpu_custom_call.1} parent=55 // pred_check_branch
          %1380 = sbr.rel (%p1378) target = $region60
        $region59: #{tpu_custom_call.1} parent=55 // pred_region
          %s1381 = sand.u32 %s182, 1
          %s1382 = scalar_lea.sflag [#allocation4], %s1381
          %s1383 = sand.u32 %s182, 1
          %s1384 = smul.addr %s1383, 8
          %s1385 = scalar_lea.vmem [#allocation3], %s1384
          %1386 = dma.done %s1382, 128
        $region60: #{tpu_custom_call.1} parent=55 // pred_fallthru
          _
      $region56: #{tpu_custom_call.1} parent=5 // pred_fallthru
        _
    $region6: #{tpu_custom_call.1} parent=1 // loop_footer
      %s20 = sadd.s32 1, %s16
    $region7: #{tpu_custom_call.1} parent=1 // loop_footer_branch
      %15 = sbr.rel target = $region3
    $region8: #{tpu_custom_call.1} parent=1 // loop_exit
      _
    %1387 = vsyncpa [#allocation4], 1
    %s1388 = scalar_lea.sflag [#allocation4], 1
    %1389 = vsyncpa %s1388, 1

</llo_original>
